<compile_context>
chip_gen: v5e
topology: v5e:2x2
jax: 0.10.0
libtpu: 0.0.40
codegen_flags: <defaults>
</compile_context>

<pallas_src>
import functools

import jax
import jax.numpy as jnp
from jax.experimental import pallas as pl
from jax.experimental.pallas import tpu as pltpu

# (N, M, num_selector_bits) for the 7 RouterBlocks of one_layer_net:
#   layer 0:    input_dimension=4 -> ceil(1+log2(5)) = 4 weights -> 3 selector bits
#   layers 1-6: input_dimension=9 -> ceil(1+log2(10)) = 5 weights -> 4 selector bits
LAYER_CFG = ((4, 3, 3),) + ((6, 3, 4),) * 5 + ((0, 3, 4),)
NUM_LAYERS = len(LAYER_CFG)
S_MAX = 16                    # max switchboxes per layer (15), padded to 16 sublanes
B_MAX = 4                     # max selector bits per switchbox
C1_COL = 0                    # packed cols [0, B)          : c1_j = (1 + s_j) / 2
C2_COL = B_MAX                # packed cols [B_MAX, B_MAX+B): c2_j = (1 - s_j) / 2
CONST_COL = 2 * B_MAX         # packed col 2*B_MAX          : trained const
W_COLS = 2 * B_MAX + 1
OUT_DIM = LAYER_CFG[-1][1]    # 3 outputs
IN_DIM = 4


def _router_net_kernel(x_ref, w_ref, out_ref, *, cfg):
    bt = x_ref.shape[1]                                  # batch lanes in this block
    h = x_ref[...]                                       # (F, Bt): features x batch

    for layer_id, (N, M, B) in enumerate(cfg):
        S = N + 3 * M                                    # switchboxes in this RouterBlock
        L = 2 ** B                                       # leaves per switch tree
        F = h.shape[0]
        wl = w_ref[layer_id]                             # (S_MAX, W_COLS)

        c1c = [wl[:S, C1_COL + j:C1_COL + j + 1] for j in range(B)]   # (S, 1)
        c2c = [wl[:S, C2_COL + j:C2_COL + j + 1] for j in range(B)]   # (S, 1)
        kc = wl[:S, CONST_COL:CONST_COL + 1]                          # (S, 1)

        # Hoisted (memoized) per-level coefficient broadcasts to (S, Bt); only
        # levels that actually touch runtime data materialize a broadcast.
        bcache = {}

        def bc(tag, j, _S=S, _bt=bt, _c1=c1c, _c2=c2c, _cache=bcache):
            if (tag, j) not in _cache:
                col = _c1[j] if tag == "c1" else _c2[j]
                _cache[(tag, j)] = jnp.broadcast_to(col, (_S, _bt))
            return _cache[(tag, j)]

        # Tagged leaves: ("rt", (1,Bt)) runtime input rows (shared by all
        # switchboxes), ("p", None) = exact -1 padding, ("k", (S,1)) trained
        # const of each switchbox (last leaf).
        vals = [("rt", h[i:i + 1, :]) if i < F else ("p", None) for i in range(L - 1)]
        vals.append(("k", kc))

        # Mux tree in coefficient form: Mux(s, a, b) == c1*a + c2*b.
        # Constant-only subtrees stay on (S,1) / exact -1; levels unrolled at
        # trace time (B <= 4).
        for j in range(B):
            nxt = []
            for i in range(len(vals) // 2):
                (ta, va), (tb, vb) = vals[2 * i], vals[2 * i + 1]
                if ta == "p" and tb == "p":
                    nxt.append(("p", None))              # Mux(s, -1, -1) == -1 exactly
                elif ta != "rt" and tb != "rt":
                    a = -c1c[j] if ta == "p" else c1c[j] * va
                    b = -c2c[j] if tb == "p" else c2c[j] * vb
                    nxt.append(("k", a + b))             # lane-constant (S, 1)
                else:
                    if ta == "rt":
                        a = bc("c1", j) * va
                    elif ta == "p":
                        a = -c1c[j]
                    else:
                        a = c1c[j] * va
                    if tb == "rt":
                        b = bc("c2", j) * vb
                    elif tb == "p":
                        b = -c2c[j]
                    else:
                        b = c2c[j] * vb
                    nxt.append(("rt", a + b))            # (S, Bt)
            vals = nxt
        box = vals[0][1]                                 # (S, Bt)

        # RouterBlock epilogue. Switchboxes were permuted host-side to
        # [skip | sel-sources | a-sources | b-sources], so these are three
        # contiguous (M, Bt) slices + one vector mux (5-op form).
        sel = box[N:N + M, :]
        a = box[N + M:N + 2 * M, :]
        b = box[N + 2 * M:N + 3 * M, :]
        comp = 0.5 * (sel * (a - b) + (a + b))           # (M, Bt)
        h = jnp.concatenate([box[:N, :], comp], axis=0) if N > 0 else comp

    out_ref[...] = h                                     # single dense (OUT_DIM, Bt) store


def init_params(key):
    """Deterministic normal(0, 0.005) init matching the torch __init__ shapes."""
    params = []
    for (N, M, B) in LAYER_CFG:
        S = N + 3 * M
        key, k_sel, k_const = jax.random.split(key, 3)
        sel = 0.005 * jax.random.normal(k_sel, (B, S), dtype=jnp.float32)
        const = 0.005 * jax.random.normal(k_const, (S,), dtype=jnp.float32)
        params.append((sel, const))
    return params


def pack_params(params):
    """Pack all layers into one (NUM_LAYERS, S_MAX, W_COLS) array.

    Columns [0,B): c1_j=(1+s_j)/2, [B_MAX,B_MAX+B): c2_j=(1-s_j)/2, CONST_COL:
    trained const.  Switchbox rows are permuted per layer so the M computed
    triplets become contiguous blocks [skip | sel | a | b].
    """
    w = jnp.zeros((NUM_LAYERS, S_MAX, W_COLS), jnp.float32)
    for l, ((N, M, B), (sel, const)) in enumerate(zip(LAYER_CFG, params)):
        S = N + 3 * M
        perm = jnp.asarray(
            list(range(N)) + [N + 3 * m + k for k in range(3) for m in range(M)],
            dtype=jnp.int32)
        sel_p = sel[:, perm]                             # (B, S) permuted switchboxes
        const_p = const[perm]                            # (S,)
        w = w.at[l, :S, C1_COL:C1_COL + B].set((0.5 * (1.0 + sel_p)).T)
        w = w.at[l, :S, C2_COL:C2_COL + B].set((0.5 * (1.0 - sel_p)).T)
        w = w.at[l, :S, CONST_COL].set(const_p)
    return w


@functools.partial(jax.jit, static_argnames=("batch_block",))
def _forward_batched(xt, w, *, batch_block):
    n_pad = xt.shape[1]
    cost = pl.CostEstimate(
        flops=n_pad * NUM_LAYERS * S_MAX * 15 * 3,
        transcendentals=0,
        bytes_accessed=n_pad * (IN_DIM + OUT_DIM) * 4 + NUM_LAYERS * S_MAX * W_COLS * 4,
    )
    return pl.pallas_call(
        functools.partial(_router_net_kernel, cfg=LAYER_CFG),
        out_shape=jax.ShapeDtypeStruct((OUT_DIM, n_pad), jnp.float32),
        grid=(n_pad // batch_block,),
        in_specs=[
            pl.BlockSpec((xt.shape[0], batch_block), lambda i: (0, i)),
            pl.BlockSpec((NUM_LAYERS, S_MAX, W_COLS), lambda i: (0, 0, 0)),
        ],
        out_specs=pl.BlockSpec((OUT_DIM, batch_block), lambda i: (0, i)),
        compiler_params=pltpu.CompilerParams(dimension_semantics=("parallel",)),
        cost_estimate=cost,
    )(xt, w)


def one_layer_net_forward(x, params, *, batch_block=1024):
    """Batched forward. x: (4,) or (batch, 4); returns (3,) or (batch, 3)."""
    x = jnp.asarray(x, jnp.float32)
    single = x.ndim == 1
    if single:
        x = x[None, :]
    n, f = x.shape
    # Lane-block sizing: multiple of 128, capped at 8192 (v7x VMEM budget), and
    # small enough that the "parallel" grid has >= 2 steps whenever the batch
    # allows it (v7x has 2 TensorCores; no-op on v5e/v6e).
    n128 = ((n + 127) // 128) * 128
    half = max(128, ((n128 // 2) // 128) * 128)
    bb = max(128, min(batch_block, half, 8192))
    bb = (bb // 128) * 128
    n_pad = ((n + bb - 1) // bb) * bb
    # lanes = batch, sublanes = features; pad batch to a multiple of the block.
    xt = jnp.zeros((f, n_pad), jnp.float32).at[:, :n].set(x.T)
    w = pack_params(params)
    out = _forward_batched(xt, w, batch_block=bb)        # (3, n_pad)
    y = out[:, :n].T
    return y[0] if single else y


def _mux_ref(s, a, b):
    # Exactly the torch Mux: 0.5 * (s*a - s*b + a + b)
    return 0.5 * (s * a - s * b + a + b)


def one_layer_net_reference(x, params):
    """Pure-JAX (XLA) port of the torch eval-mode forward, for checking."""
    h = jnp.asarray(x, jnp.float32)
    for (N, M, B), (sel, const) in zip(LAYER_CFG, params):
        S = N + 3 * M
        L = 2 ** B
        n, F = h.shape
        pad = jnp.full((n, L - 1 - F), -1.0, jnp.float32)
        base = jnp.concatenate([h, pad], axis=1)                      # (n, L-1)
        leaves = jnp.broadcast_to(base[:, None, :], (n, S, L - 1))
        const_leaf = jnp.broadcast_to(const[None, :, None], (n, S, 1))
        vals = jnp.concatenate([leaves, const_leaf], axis=2)          # (n, S, L)
        for j in range(B):
            s_j = sel[j][None, :, None]
            vals = _mux_ref(s_j, vals[:, :, 0::2], vals[:, :, 1::2])
        box = vals[:, :, 0]                                           # (n, S)
        proc = box[:, N:]
        comp = _mux_ref(proc[:, 0::3], proc[:, 1::3], proc[:, 2::3])  # (n, M)
        h = jnp.concatenate([box[:, :N], comp], axis=1)
    return h


if __name__ == "__main__":
    key = jax.random.PRNGKey(0)
    k_x, k_p = jax.random.split(key)

    batch = 256            # small demo batch; lanes carry the batch inside the kernel
    x = jax.random.normal(k_x, (batch, IN_DIM), dtype=jnp.float32)
    params = init_params(k_p)

    y = one_layer_net_forward(x, params)
    jax.block_until_ready(y)
    assert y.shape == (batch, OUT_DIM) and y.dtype == jnp.float32

    # Check against a pure-JAX port of the torch eval-mode forward.
    y_ref = one_layer_net_reference(x, params)
    max_err = float(jnp.max(jnp.abs(y - y_ref)))
    assert max_err < 5e-4, max_err

    # Original single-sample interface of the torch module: (4,) -> (3,)
    y1 = one_layer_net_forward(x[0], params)
    assert y1.shape == (OUT_DIM,)
    assert float(jnp.max(jnp.abs(y1 - y_ref[0]))) < 5e-4

    print("KERNEL_OK")
</pallas_src>

<mosaic_0001>
module attributes {stable_mosaic.version = 11 : i64} {
  func.func @_router_net_kernel(%arg0: i32, %arg1: memref<4x128xf32, #tpu.memory_space<vmem>>, %arg2: memref<7x16x9xf32, #tpu.memory_space<vmem>>, %arg3: memref<3x128xf32, #tpu.memory_space<vmem>>) attributes {dimension_semantics = [#tpu.dimension_semantics<parallel>], iteration_bounds = array<i64: 2>, scalar_prefetch = 0 : i64, scratch_operands = 0 : i64, tpu.core_type = #tpu.core_type<tc>, window_params = [{transform_indices = @transform_0, window_bounds = array<i64: 4, 128>}, {pipeline_mode = #tpu.pipeline_mode<synchronous>, transform_indices = @transform_1, window_bounds = array<i64: 7, 16, 9>}, {transform_indices = @transform_2, window_bounds = array<i64: 3, 128>}]} {
    %c0 = arith.constant 0 : index
    %c0_0 = arith.constant 0 : index
    %0 = vector.load %arg1[%c0, %c0_0] : memref<4x128xf32, #tpu.memory_space<vmem>>, vector<4x128xf32>
    %c0_1 = arith.constant 0 : index
    %c0_2 = arith.constant 0 : index
    %c0_3 = arith.constant 0 : index
    %1 = vector.load %arg2[%c0_1, %c0_2, %c0_3] : memref<7x16x9xf32, #tpu.memory_space<vmem>>, vector<1x16x9xf32>
    %2 = vector.shape_cast %1 : vector<1x16x9xf32> to vector<16x9xf32>
    %3 = vector.extract_strided_slice %2 {offsets = [0, 0], sizes = [13, 1], strides = [1, 1]} : vector<16x9xf32> to vector<13x1xf32>
    %4 = vector.extract_strided_slice %2 {offsets = [0, 1], sizes = [13, 1], strides = [1, 1]} : vector<16x9xf32> to vector<13x1xf32>
    %5 = vector.extract_strided_slice %2 {offsets = [0, 2], sizes = [13, 1], strides = [1, 1]} : vector<16x9xf32> to vector<13x1xf32>
    %6 = vector.extract_strided_slice %2 {offsets = [0, 4], sizes = [13, 1], strides = [1, 1]} : vector<16x9xf32> to vector<13x1xf32>
    %7 = vector.extract_strided_slice %2 {offsets = [0, 5], sizes = [13, 1], strides = [1, 1]} : vector<16x9xf32> to vector<13x1xf32>
    %8 = vector.extract_strided_slice %2 {offsets = [0, 6], sizes = [13, 1], strides = [1, 1]} : vector<16x9xf32> to vector<13x1xf32>
    %9 = vector.extract_strided_slice %2 {offsets = [0, 8], sizes = [13, 1], strides = [1, 1]} : vector<16x9xf32> to vector<13x1xf32>
    %10 = vector.extract_strided_slice %0 {offsets = [0, 0], sizes = [1, 128], strides = [1, 1]} : vector<4x128xf32> to vector<1x128xf32>
    %11 = vector.extract_strided_slice %0 {offsets = [1, 0], sizes = [1, 128], strides = [1, 1]} : vector<4x128xf32> to vector<1x128xf32>
    %12 = vector.extract_strided_slice %0 {offsets = [2, 0], sizes = [1, 128], strides = [1, 1]} : vector<4x128xf32> to vector<1x128xf32>
    %13 = vector.extract_strided_slice %0 {offsets = [3, 0], sizes = [1, 128], strides = [1, 1]} : vector<4x128xf32> to vector<1x128xf32>
    %14 = vector.shape_cast %3 : vector<13x1xf32> to vector<13x1xf32>
    %15 = vector.broadcast %14 : vector<13x1xf32> to vector<13x128xf32>
    %16 = vector.broadcast %10 : vector<1x128xf32> to vector<13x128xf32>
    %17 = arith.mulf %15, %16 : vector<13x128xf32>
    %18 = vector.shape_cast %6 : vector<13x1xf32> to vector<13x1xf32>
    %19 = vector.broadcast %18 : vector<13x1xf32> to vector<13x128xf32>
    %20 = vector.broadcast %11 : vector<1x128xf32> to vector<13x128xf32>
    %21 = arith.mulf %19, %20 : vector<13x128xf32>
    %22 = arith.addf %17, %21 : vector<13x128xf32>
    %23 = vector.broadcast %12 : vector<1x128xf32> to vector<13x128xf32>
    %24 = arith.mulf %15, %23 : vector<13x128xf32>
    %25 = vector.broadcast %13 : vector<1x128xf32> to vector<13x128xf32>
    %26 = arith.mulf %19, %25 : vector<13x128xf32>
    %27 = arith.addf %24, %26 : vector<13x128xf32>
    %cst = arith.constant 0.000000e+00 : f32
    %28 = vector.broadcast %cst : f32 to vector<13x1xf32>
    %29 = arith.subf %28, %3 : vector<13x1xf32>
    %30 = arith.mulf %6, %9 : vector<13x1xf32>
    %31 = arith.addf %29, %30 : vector<13x1xf32>
    %32 = vector.shape_cast %4 : vector<13x1xf32> to vector<13x1xf32>
    %33 = vector.broadcast %32 : vector<13x1xf32> to vector<13x128xf32>
    %34 = arith.mulf %33, %22 : vector<13x128xf32>
    %35 = vector.shape_cast %7 : vector<13x1xf32> to vector<13x1xf32>
    %36 = vector.broadcast %35 : vector<13x1xf32> to vector<13x128xf32>
    %37 = arith.mulf %36, %27 : vector<13x128xf32>
    %38 = arith.addf %34, %37 : vector<13x128xf32>
    %cst_4 = arith.constant 0.000000e+00 : f32
    %39 = vector.broadcast %cst_4 : f32 to vector<13x1xf32>
    %40 = arith.subf %39, %4 : vector<13x1xf32>
    %41 = arith.mulf %7, %31 : vector<13x1xf32>
    %42 = arith.addf %40, %41 : vector<13x1xf32>
    %43 = vector.shape_cast %5 : vector<13x1xf32> to vector<13x1xf32>
    %44 = vector.broadcast %43 : vector<13x1xf32> to vector<13x128xf32>
    %45 = arith.mulf %44, %38 : vector<13x128xf32>
    %46 = arith.mulf %8, %42 : vector<13x1xf32>
    %47 = vector.broadcast %46 : vector<13x1xf32> to vector<13x128xf32>
    %48 = arith.addf %45, %47 : vector<13x128xf32>
    %49 = vector.extract_strided_slice %48 {offsets = [4, 0], sizes = [3, 128], strides = [1, 1]} : vector<13x128xf32> to vector<3x128xf32>
    %50 = vector.extract_strided_slice %48 {offsets = [7, 0], sizes = [3, 128], strides = [1, 1]} : vector<13x128xf32> to vector<3x128xf32>
    %51 = vector.extract_strided_slice %48 {offsets = [10, 0], sizes = [3, 128], strides = [1, 1]} : vector<13x128xf32> to vector<3x128xf32>
    %52 = arith.subf %50, %51 : vector<3x128xf32>
    %53 = arith.mulf %49, %52 : vector<3x128xf32>
    %54 = arith.addf %50, %51 : vector<3x128xf32>
    %55 = arith.addf %53, %54 : vector<3x128xf32>
    %cst_5 = arith.constant 5.000000e-01 : f32
    %56 = vector.broadcast %cst_5 : f32 to vector<3x128xf32>
    %57 = arith.mulf %56, %55 : vector<3x128xf32>
    %58 = vector.extract_strided_slice %48 {offsets = [0, 0], sizes = [4, 128], strides = [1, 1]} : vector<13x128xf32> to vector<4x128xf32>
    %59 = tpu.concatenate %58, %57 in 0 : vector<4x128xf32>, vector<3x128xf32> -> vector<7x128xf32>
    %c1 = arith.constant 1 : index
    %c0_6 = arith.constant 0 : index
    %c0_7 = arith.constant 0 : index
    %60 = vector.load %arg2[%c1, %c0_6, %c0_7] : memref<7x16x9xf32, #tpu.memory_space<vmem>>, vector<1x16x9xf32>
    %61 = vector.shape_cast %60 : vector<1x16x9xf32> to vector<16x9xf32>
    %62 = vector.extract_strided_slice %61 {offsets = [0, 0], sizes = [15, 1], strides = [1, 1]} : vector<16x9xf32> to vector<15x1xf32>
    %63 = vector.extract_strided_slice %61 {offsets = [0, 1], sizes = [15, 1], strides = [1, 1]} : vector<16x9xf32> to vector<15x1xf32>
    %64 = vector.extract_strided_slice %61 {offsets = [0, 2], sizes = [15, 1], strides = [1, 1]} : vector<16x9xf32> to vector<15x1xf32>
    %65 = vector.extract_strided_slice %61 {offsets = [0, 3], sizes = [15, 1], strides = [1, 1]} : vector<16x9xf32> to vector<15x1xf32>
    %66 = vector.extract_strided_slice %61 {offsets = [0, 4], sizes = [15, 1], strides = [1, 1]} : vector<16x9xf32> to vector<15x1xf32>
    %67 = vector.extract_strided_slice %61 {offsets = [0, 5], sizes = [15, 1], strides = [1, 1]} : vector<16x9xf32> to vector<15x1xf32>
    %68 = vector.extract_strided_slice %61 {offsets = [0, 6], sizes = [15, 1], strides = [1, 1]} : vector<16x9xf32> to vector<15x1xf32>
    %69 = vector.extract_strided_slice %61 {offsets = [0, 7], sizes = [15, 1], strides = [1, 1]} : vector<16x9xf32> to vector<15x1xf32>
    %70 = vector.extract_strided_slice %61 {offsets = [0, 8], sizes = [15, 1], strides = [1, 1]} : vector<16x9xf32> to vector<15x1xf32>
    %71 = vector.extract_strided_slice %59 {offsets = [0, 0], sizes = [1, 128], strides = [1, 1]} : vector<7x128xf32> to vector<1x128xf32>
    %72 = vector.extract_strided_slice %59 {offsets = [1, 0], sizes = [1, 128], strides = [1, 1]} : vector<7x128xf32> to vector<1x128xf32>
    %73 = vector.extract_strided_slice %59 {offsets = [2, 0], sizes = [1, 128], strides = [1, 1]} : vector<7x128xf32> to vector<1x128xf32>
    %74 = vector.extract_strided_slice %59 {offsets = [3, 0], sizes = [1, 128], strides = [1, 1]} : vector<7x128xf32> to vector<1x128xf32>
    %75 = vector.extract_strided_slice %59 {offsets = [4, 0], sizes = [1, 128], strides = [1, 1]} : vector<7x128xf32> to vector<1x128xf32>
    %76 = vector.extract_strided_slice %59 {offsets = [5, 0], sizes = [1, 128], strides = [1, 1]} : vector<7x128xf32> to vector<1x128xf32>
    %77 = vector.extract_strided_slice %59 {offsets = [6, 0], sizes = [1, 128], strides = [1, 1]} : vector<7x128xf32> to vector<1x128xf32>
    %78 = vector.shape_cast %62 : vector<15x1xf32> to vector<15x1xf32>
    %79 = vector.broadcast %78 : vector<15x1xf32> to vector<15x128xf32>
    %80 = vector.broadcast %71 : vector<1x128xf32> to vector<15x128xf32>
    %81 = arith.mulf %79, %80 : vector<15x128xf32>
    %82 = vector.shape_cast %66 : vector<15x1xf32> to vector<15x1xf32>
    %83 = vector.broadcast %82 : vector<15x1xf32> to vector<15x128xf32>
    %84 = vector.broadcast %72 : vector<1x128xf32> to vector<15x128xf32>
    %85 = arith.mulf %83, %84 : vector<15x128xf32>
    %86 = arith.addf %81, %85 : vector<15x128xf32>
    %87 = vector.broadcast %73 : vector<1x128xf32> to vector<15x128xf32>
    %88 = arith.mulf %79, %87 : vector<15x128xf32>
    %89 = vector.broadcast %74 : vector<1x128xf32> to vector<15x128xf32>
    %90 = arith.mulf %83, %89 : vector<15x128xf32>
    %91 = arith.addf %88, %90 : vector<15x128xf32>
    %92 = vector.broadcast %75 : vector<1x128xf32> to vector<15x128xf32>
    %93 = arith.mulf %79, %92 : vector<15x128xf32>
    %94 = vector.broadcast %76 : vector<1x128xf32> to vector<15x128xf32>
    %95 = arith.mulf %83, %94 : vector<15x128xf32>
    %96 = arith.addf %93, %95 : vector<15x128xf32>
    %97 = vector.broadcast %77 : vector<1x128xf32> to vector<15x128xf32>
    %98 = arith.mulf %79, %97 : vector<15x128xf32>
    %cst_8 = arith.constant 0.000000e+00 : f32
    %99 = vector.broadcast %cst_8 : f32 to vector<15x1xf32>
    %100 = arith.subf %99, %66 : vector<15x1xf32>
    %101 = vector.broadcast %100 : vector<15x1xf32> to vector<15x128xf32>
    %102 = arith.addf %98, %101 : vector<15x128xf32>
    %cst_9 = arith.constant 0.000000e+00 : f32
    %103 = vector.broadcast %cst_9 : f32 to vector<15x1xf32>
    %104 = arith.subf %103, %62 : vector<15x1xf32>
    %105 = arith.mulf %66, %70 : vector<15x1xf32>
    %106 = arith.addf %104, %105 : vector<15x1xf32>
    %107 = vector.shape_cast %63 : vector<15x1xf32> to vector<15x1xf32>
    %108 = vector.broadcast %107 : vector<15x1xf32> to vector<15x128xf32>
    %109 = arith.mulf %108, %86 : vector<15x128xf32>
    %110 = vector.shape_cast %67 : vector<15x1xf32> to vector<15x1xf32>
    %111 = vector.broadcast %110 : vector<15x1xf32> to vector<15x128xf32>
    %112 = arith.mulf %111, %91 : vector<15x128xf32>
    %113 = arith.addf %109, %112 : vector<15x128xf32>
    %114 = arith.mulf %108, %96 : vector<15x128xf32>
    %115 = arith.mulf %111, %102 : vector<15x128xf32>
    %116 = arith.addf %114, %115 : vector<15x128xf32>
    %cst_10 = arith.constant 0.000000e+00 : f32
    %117 = vector.broadcast %cst_10 : f32 to vector<15x1xf32>
    %118 = arith.subf %117, %63 : vector<15x1xf32>
    %119 = arith.mulf %67, %106 : vector<15x1xf32>
    %120 = arith.addf %118, %119 : vector<15x1xf32>
    %121 = vector.shape_cast %64 : vector<15x1xf32> to vector<15x1xf32>
    %122 = vector.broadcast %121 : vector<15x1xf32> to vector<15x128xf32>
    %123 = arith.mulf %122, %113 : vector<15x128xf32>
    %124 = vector.shape_cast %68 : vector<15x1xf32> to vector<15x1xf32>
    %125 = vector.broadcast %124 : vector<15x1xf32> to vector<15x128xf32>
    %126 = arith.mulf %125, %116 : vector<15x128xf32>
    %127 = arith.addf %123, %126 : vector<15x128xf32>
    %cst_11 = arith.constant 0.000000e+00 : f32
    %128 = vector.broadcast %cst_11 : f32 to vector<15x1xf32>
    %129 = arith.subf %128, %64 : vector<15x1xf32>
    %130 = arith.mulf %68, %120 : vector<15x1xf32>
    %131 = arith.addf %129, %130 : vector<15x1xf32>
    %132 = vector.shape_cast %65 : vector<15x1xf32> to vector<15x1xf32>
    %133 = vector.broadcast %132 : vector<15x1xf32> to vector<15x128xf32>
    %134 = arith.mulf %133, %127 : vector<15x128xf32>
    %135 = arith.mulf %69, %131 : vector<15x1xf32>
    %136 = vector.broadcast %135 : vector<15x1xf32> to vector<15x128xf32>
    %137 = arith.addf %134, %136 : vector<15x128xf32>
    %138 = vector.extract_strided_slice %137 {offsets = [6, 0], sizes = [3, 128], strides = [1, 1]} : vector<15x128xf32> to vector<3x128xf32>
    %139 = vector.extract_strided_slice %137 {offsets = [9, 0], sizes = [3, 128], strides = [1, 1]} : vector<15x128xf32> to vector<3x128xf32>
    %140 = vector.extract_strided_slice %137 {offsets = [12, 0], sizes = [3, 128], strides = [1, 1]} : vector<15x128xf32> to vector<3x128xf32>
    %141 = arith.subf %139, %140 : vector<3x128xf32>
    %142 = arith.mulf %138, %141 : vector<3x128xf32>
    %143 = arith.addf %139, %140 : vector<3x128xf32>
    %144 = arith.addf %142, %143 : vector<3x128xf32>
    %cst_12 = arith.constant 5.000000e-01 : f32
    %145 = vector.broadcast %cst_12 : f32 to vector<3x128xf32>
    %146 = arith.mulf %145, %144 : vector<3x128xf32>
    %147 = vector.extract_strided_slice %137 {offsets = [0, 0], sizes = [6, 128], strides = [1, 1]} : vector<15x128xf32> to vector<6x128xf32>
    %148 = tpu.concatenate %147, %146 in 0 : vector<6x128xf32>, vector<3x128xf32> -> vector<9x128xf32>
    %c2 = arith.constant 2 : index
    %c0_13 = arith.constant 0 : index
    %c0_14 = arith.constant 0 : index
    %149 = vector.load %arg2[%c2, %c0_13, %c0_14] : memref<7x16x9xf32, #tpu.memory_space<vmem>>, vector<1x16x9xf32>
    %150 = vector.shape_cast %149 : vector<1x16x9xf32> to vector<16x9xf32>
    %151 = vector.extract_strided_slice %150 {offsets = [0, 0], sizes = [15, 1], strides = [1, 1]} : vector<16x9xf32> to vector<15x1xf32>
    %152 = vector.extract_strided_slice %150 {offsets = [0, 1], sizes = [15, 1], strides = [1, 1]} : vector<16x9xf32> to vector<15x1xf32>
    %153 = vector.extract_strided_slice %150 {offsets = [0, 2], sizes = [15, 1], strides = [1, 1]} : vector<16x9xf32> to vector<15x1xf32>
    %154 = vector.extract_strided_slice %150 {offsets = [0, 3], sizes = [15, 1], strides = [1, 1]} : vector<16x9xf32> to vector<15x1xf32>
    %155 = vector.extract_strided_slice %150 {offsets = [0, 4], sizes = [15, 1], strides = [1, 1]} : vector<16x9xf32> to vector<15x1xf32>
    %156 = vector.extract_strided_slice %150 {offsets = [0, 5], sizes = [15, 1], strides = [1, 1]} : vector<16x9xf32> to vector<15x1xf32>
    %157 = vector.extract_strided_slice %150 {offsets = [0, 6], sizes = [15, 1], strides = [1, 1]} : vector<16x9xf32> to vector<15x1xf32>
    %158 = vector.extract_strided_slice %150 {offsets = [0, 7], sizes = [15, 1], strides = [1, 1]} : vector<16x9xf32> to vector<15x1xf32>
    %159 = vector.extract_strided_slice %150 {offsets = [0, 8], sizes = [15, 1], strides = [1, 1]} : vector<16x9xf32> to vector<15x1xf32>
    %160 = vector.extract_strided_slice %148 {offsets = [0, 0], sizes = [1, 128], strides = [1, 1]} : vector<9x128xf32> to vector<1x128xf32>
    %161 = vector.extract_strided_slice %148 {offsets = [1, 0], sizes = [1, 128], strides = [1, 1]} : vector<9x128xf32> to vector<1x128xf32>
    %162 = vector.extract_strided_slice %148 {offsets = [2, 0], sizes = [1, 128], strides = [1, 1]} : vector<9x128xf32> to vector<1x128xf32>
    %163 = vector.extract_strided_slice %148 {offsets = [3, 0], sizes = [1, 128], strides = [1, 1]} : vector<9x128xf32> to vector<1x128xf32>
    %164 = vector.extract_strided_slice %148 {offsets = [4, 0], sizes = [1, 128], strides = [1, 1]} : vector<9x128xf32> to vector<1x128xf32>
    %165 = vector.extract_strided_slice %148 {offsets = [5, 0], sizes = [1, 128], strides = [1, 1]} : vector<9x128xf32> to vector<1x128xf32>
    %166 = vector.extract_strided_slice %148 {offsets = [6, 0], sizes = [1, 128], strides = [1, 1]} : vector<9x128xf32> to vector<1x128xf32>
    %167 = vector.extract_strided_slice %148 {offsets = [7, 0], sizes = [1, 128], strides = [1, 1]} : vector<9x128xf32> to vector<1x128xf32>
    %168 = vector.extract_strided_slice %148 {offsets = [8, 0], sizes = [1, 128], strides = [1, 1]} : vector<9x128xf32> to vector<1x128xf32>
    %169 = vector.shape_cast %151 : vector<15x1xf32> to vector<15x1xf32>
    %170 = vector.broadcast %169 : vector<15x1xf32> to vector<15x128xf32>
    %171 = vector.broadcast %160 : vector<1x128xf32> to vector<15x128xf32>
    %172 = arith.mulf %170, %171 : vector<15x128xf32>
    %173 = vector.shape_cast %155 : vector<15x1xf32> to vector<15x1xf32>
    %174 = vector.broadcast %173 : vector<15x1xf32> to vector<15x128xf32>
    %175 = vector.broadcast %161 : vector<1x128xf32> to vector<15x128xf32>
    %176 = arith.mulf %174, %175 : vector<15x128xf32>
    %177 = arith.addf %172, %176 : vector<15x128xf32>
    %178 = vector.broadcast %162 : vector<1x128xf32> to vector<15x128xf32>
    %179 = arith.mulf %170, %178 : vector<15x128xf32>
    %180 = vector.broadcast %163 : vector<1x128xf32> to vector<15x128xf32>
    %181 = arith.mulf %174, %180 : vector<15x128xf32>
    %182 = arith.addf %179, %181 : vector<15x128xf32>
    %183 = vector.broadcast %164 : vector<1x128xf32> to vector<15x128xf32>
    %184 = arith.mulf %170, %183 : vector<15x128xf32>
    %185 = vector.broadcast %165 : vector<1x128xf32> to vector<15x128xf32>
    %186 = arith.mulf %174, %185 : vector<15x128xf32>
    %187 = arith.addf %184, %186 : vector<15x128xf32>
    %188 = vector.broadcast %166 : vector<1x128xf32> to vector<15x128xf32>
    %189 = arith.mulf %170, %188 : vector<15x128xf32>
    %190 = vector.broadcast %167 : vector<1x128xf32> to vector<15x128xf32>
    %191 = arith.mulf %174, %190 : vector<15x128xf32>
    %192 = arith.addf %189, %191 : vector<15x128xf32>
    %193 = vector.broadcast %168 : vector<1x128xf32> to vector<15x128xf32>
    %194 = arith.mulf %170, %193 : vector<15x128xf32>
    %cst_15 = arith.constant 0.000000e+00 : f32
    %195 = vector.broadcast %cst_15 : f32 to vector<15x1xf32>
    %196 = arith.subf %195, %155 : vector<15x1xf32>
    %197 = vector.broadcast %196 : vector<15x1xf32> to vector<15x128xf32>
    %198 = arith.addf %194, %197 : vector<15x128xf32>
    %cst_16 = arith.constant 0.000000e+00 : f32
    %199 = vector.broadcast %cst_16 : f32 to vector<15x1xf32>
    %200 = arith.subf %199, %151 : vector<15x1xf32>
    %201 = arith.mulf %155, %159 : vector<15x1xf32>
    %202 = arith.addf %200, %201 : vector<15x1xf32>
    %203 = vector.shape_cast %152 : vector<15x1xf32> to vector<15x1xf32>
    %204 = vector.broadcast %203 : vector<15x1xf32> to vector<15x128xf32>
    %205 = arith.mulf %204, %177 : vector<15x128xf32>
    %206 = vector.shape_cast %156 : vector<15x1xf32> to vector<15x1xf32>
    %207 = vector.broadcast %206 : vector<15x1xf32> to vector<15x128xf32>
    %208 = arith.mulf %207, %182 : vector<15x128xf32>
    %209 = arith.addf %205, %208 : vector<15x128xf32>
    %210 = arith.mulf %204, %187 : vector<15x128xf32>
    %211 = arith.mulf %207, %192 : vector<15x128xf32>
    %212 = arith.addf %210, %211 : vector<15x128xf32>
    %213 = arith.mulf %204, %198 : vector<15x128xf32>
    %cst_17 = arith.constant 0.000000e+00 : f32
    %214 = vector.broadcast %cst_17 : f32 to vector<15x1xf32>
    %215 = arith.subf %214, %156 : vector<15x1xf32>
    %216 = vector.broadcast %215 : vector<15x1xf32> to vector<15x128xf32>
    %217 = arith.addf %213, %216 : vector<15x128xf32>
    %cst_18 = arith.constant 0.000000e+00 : f32
    %218 = vector.broadcast %cst_18 : f32 to vector<15x1xf32>
    %219 = arith.subf %218, %152 : vector<15x1xf32>
    %220 = arith.mulf %156, %202 : vector<15x1xf32>
    %221 = arith.addf %219, %220 : vector<15x1xf32>
    %222 = vector.shape_cast %153 : vector<15x1xf32> to vector<15x1xf32>
    %223 = vector.broadcast %222 : vector<15x1xf32> to vector<15x128xf32>
    %224 = arith.mulf %223, %209 : vector<15x128xf32>
    %225 = vector.shape_cast %157 : vector<15x1xf32> to vector<15x1xf32>
    %226 = vector.broadcast %225 : vector<15x1xf32> to vector<15x128xf32>
    %227 = arith.mulf %226, %212 : vector<15x128xf32>
    %228 = arith.addf %224, %227 : vector<15x128xf32>
    %229 = arith.mulf %223, %217 : vector<15x128xf32>
    %230 = arith.mulf %157, %221 : vector<15x1xf32>
    %231 = vector.broadcast %230 : vector<15x1xf32> to vector<15x128xf32>
    %232 = arith.addf %229, %231 : vector<15x128xf32>
    %233 = vector.shape_cast %154 : vector<15x1xf32> to vector<15x1xf32>
    %234 = vector.broadcast %233 : vector<15x1xf32> to vector<15x128xf32>
    %235 = arith.mulf %234, %228 : vector<15x128xf32>
    %236 = vector.shape_cast %158 : vector<15x1xf32> to vector<15x1xf32>
    %237 = vector.broadcast %236 : vector<15x1xf32> to vector<15x128xf32>
    %238 = arith.mulf %237, %232 : vector<15x128xf32>
    %239 = arith.addf %235, %238 : vector<15x128xf32>
    %240 = vector.extract_strided_slice %239 {offsets = [6, 0], sizes = [3, 128], strides = [1, 1]} : vector<15x128xf32> to vector<3x128xf32>
    %241 = vector.extract_strided_slice %239 {offsets = [9, 0], sizes = [3, 128], strides = [1, 1]} : vector<15x128xf32> to vector<3x128xf32>
    %242 = vector.extract_strided_slice %239 {offsets = [12, 0], sizes = [3, 128], strides = [1, 1]} : vector<15x128xf32> to vector<3x128xf32>
    %243 = arith.subf %241, %242 : vector<3x128xf32>
    %244 = arith.mulf %240, %243 : vector<3x128xf32>
    %245 = arith.addf %241, %242 : vector<3x128xf32>
    %246 = arith.addf %244, %245 : vector<3x128xf32>
    %cst_19 = arith.constant 5.000000e-01 : f32
    %247 = vector.broadcast %cst_19 : f32 to vector<3x128xf32>
    %248 = arith.mulf %247, %246 : vector<3x128xf32>
    %249 = vector.extract_strided_slice %239 {offsets = [0, 0], sizes = [6, 128], strides = [1, 1]} : vector<15x128xf32> to vector<6x128xf32>
    %250 = tpu.concatenate %249, %248 in 0 : vector<6x128xf32>, vector<3x128xf32> -> vector<9x128xf32>
    %c3 = arith.constant 3 : index
    %c0_20 = arith.constant 0 : index
    %c0_21 = arith.constant 0 : index
    %251 = vector.load %arg2[%c3, %c0_20, %c0_21] : memref<7x16x9xf32, #tpu.memory_space<vmem>>, vector<1x16x9xf32>
    %252 = vector.shape_cast %251 : vector<1x16x9xf32> to vector<16x9xf32>
    %253 = vector.extract_strided_slice %252 {offsets = [0, 0], sizes = [15, 1], strides = [1, 1]} : vector<16x9xf32> to vector<15x1xf32>
    %254 = vector.extract_strided_slice %252 {offsets = [0, 1], sizes = [15, 1], strides = [1, 1]} : vector<16x9xf32> to vector<15x1xf32>
    %255 = vector.extract_strided_slice %252 {offsets = [0, 2], sizes = [15, 1], strides = [1, 1]} : vector<16x9xf32> to vector<15x1xf32>
    %256 = vector.extract_strided_slice %252 {offsets = [0, 3], sizes = [15, 1], strides = [1, 1]} : vector<16x9xf32> to vector<15x1xf32>
    %257 = vector.extract_strided_slice %252 {offsets = [0, 4], sizes = [15, 1], strides = [1, 1]} : vector<16x9xf32> to vector<15x1xf32>
    %258 = vector.extract_strided_slice %252 {offsets = [0, 5], sizes = [15, 1], strides = [1, 1]} : vector<16x9xf32> to vector<15x1xf32>
    %259 = vector.extract_strided_slice %252 {offsets = [0, 6], sizes = [15, 1], strides = [1, 1]} : vector<16x9xf32> to vector<15x1xf32>
    %260 = vector.extract_strided_slice %252 {offsets = [0, 7], sizes = [15, 1], strides = [1, 1]} : vector<16x9xf32> to vector<15x1xf32>
    %261 = vector.extract_strided_slice %252 {offsets = [0, 8], sizes = [15, 1], strides = [1, 1]} : vector<16x9xf32> to vector<15x1xf32>
    %262 = vector.extract_strided_slice %250 {offsets = [0, 0], sizes = [1, 128], strides = [1, 1]} : vector<9x128xf32> to vector<1x128xf32>
    %263 = vector.extract_strided_slice %250 {offsets = [1, 0], sizes = [1, 128], strides = [1, 1]} : vector<9x128xf32> to vector<1x128xf32>
    %264 = vector.extract_strided_slice %250 {offsets = [2, 0], sizes = [1, 128], strides = [1, 1]} : vector<9x128xf32> to vector<1x128xf32>
    %265 = vector.extract_strided_slice %250 {offsets = [3, 0], sizes = [1, 128], strides = [1, 1]} : vector<9x128xf32> to vector<1x128xf32>
    %266 = vector.extract_strided_slice %250 {offsets = [4, 0], sizes = [1, 128], strides = [1, 1]} : vector<9x128xf32> to vector<1x128xf32>
    %267 = vector.extract_strided_slice %250 {offsets = [5, 0], sizes = [1, 128], strides = [1, 1]} : vector<9x128xf32> to vector<1x128xf32>
    %268 = vector.extract_strided_slice %250 {offsets = [6, 0], sizes = [1, 128], strides = [1, 1]} : vector<9x128xf32> to vector<1x128xf32>
    %269 = vector.extract_strided_slice %250 {offsets = [7, 0], sizes = [1, 128], strides = [1, 1]} : vector<9x128xf32> to vector<1x128xf32>
    %270 = vector.extract_strided_slice %250 {offsets = [8, 0], sizes = [1, 128], strides = [1, 1]} : vector<9x128xf32> to vector<1x128xf32>
    %271 = vector.shape_cast %253 : vector<15x1xf32> to vector<15x1xf32>
    %272 = vector.broadcast %271 : vector<15x1xf32> to vector<15x128xf32>
    %273 = vector.broadcast %262 : vector<1x128xf32> to vector<15x128xf32>
    %274 = arith.mulf %272, %273 : vector<15x128xf32>
    %275 = vector.shape_cast %257 : vector<15x1xf32> to vector<15x1xf32>
    %276 = vector.broadcast %275 : vector<15x1xf32> to vector<15x128xf32>
    %277 = vector.broadcast %263 : vector<1x128xf32> to vector<15x128xf32>
    %278 = arith.mulf %276, %277 : vector<15x128xf32>
    %279 = arith.addf %274, %278 : vector<15x128xf32>
    %280 = vector.broadcast %264 : vector<1x128xf32> to vector<15x128xf32>
    %281 = arith.mulf %272, %280 : vector<15x128xf32>
    %282 = vector.broadcast %265 : vector<1x128xf32> to vector<15x128xf32>
    %283 = arith.mulf %276, %282 : vector<15x128xf32>
    %284 = arith.addf %281, %283 : vector<15x128xf32>
    %285 = vector.broadcast %266 : vector<1x128xf32> to vector<15x128xf32>
    %286 = arith.mulf %272, %285 : vector<15x128xf32>
    %287 = vector.broadcast %267 : vector<1x128xf32> to vector<15x128xf32>
    %288 = arith.mulf %276, %287 : vector<15x128xf32>
    %289 = arith.addf %286, %288 : vector<15x128xf32>
    %290 = vector.broadcast %268 : vector<1x128xf32> to vector<15x128xf32>
    %291 = arith.mulf %272, %290 : vector<15x128xf32>
    %292 = vector.broadcast %269 : vector<1x128xf32> to vector<15x128xf32>
    %293 = arith.mulf %276, %292 : vector<15x128xf32>
    %294 = arith.addf %291, %293 : vector<15x128xf32>
    %295 = vector.broadcast %270 : vector<1x128xf32> to vector<15x128xf32>
    %296 = arith.mulf %272, %295 : vector<15x128xf32>
    %cst_22 = arith.constant 0.000000e+00 : f32
    %297 = vector.broadcast %cst_22 : f32 to vector<15x1xf32>
    %298 = arith.subf %297, %257 : vector<15x1xf32>
    %299 = vector.broadcast %298 : vector<15x1xf32> to vector<15x128xf32>
    %300 = arith.addf %296, %299 : vector<15x128xf32>
    %cst_23 = arith.constant 0.000000e+00 : f32
    %301 = vector.broadcast %cst_23 : f32 to vector<15x1xf32>
    %302 = arith.subf %301, %253 : vector<15x1xf32>
    %303 = arith.mulf %257, %261 : vector<15x1xf32>
    %304 = arith.addf %302, %303 : vector<15x1xf32>
    %305 = vector.shape_cast %254 : vector<15x1xf32> to vector<15x1xf32>
    %306 = vector.broadcast %305 : vector<15x1xf32> to vector<15x128xf32>
    %307 = arith.mulf %306, %279 : vector<15x128xf32>
    %308 = vector.shape_cast %258 : vector<15x1xf32> to vector<15x1xf32>
    %309 = vector.broadcast %308 : vector<15x1xf32> to vector<15x128xf32>
    %310 = arith.mulf %309, %284 : vector<15x128xf32>
    %311 = arith.addf %307, %310 : vector<15x128xf32>
    %312 = arith.mulf %306, %289 : vector<15x128xf32>
    %313 = arith.mulf %309, %294 : vector<15x128xf32>
    %314 = arith.addf %312, %313 : vector<15x128xf32>
    %315 = arith.mulf %306, %300 : vector<15x128xf32>
    %cst_24 = arith.constant 0.000000e+00 : f32
    %316 = vector.broadcast %cst_24 : f32 to vector<15x1xf32>
    %317 = arith.subf %316, %258 : vector<15x1xf32>
    %318 = vector.broadcast %317 : vector<15x1xf32> to vector<15x128xf32>
    %319 = arith.addf %315, %318 : vector<15x128xf32>
    %cst_25 = arith.constant 0.000000e+00 : f32
    %320 = vector.broadcast %cst_25 : f32 to vector<15x1xf32>
    %321 = arith.subf %320, %254 : vector<15x1xf32>
    %322 = arith.mulf %258, %304 : vector<15x1xf32>
    %323 = arith.addf %321, %322 : vector<15x1xf32>
    %324 = vector.shape_cast %255 : vector<15x1xf32> to vector<15x1xf32>
    %325 = vector.broadcast %324 : vector<15x1xf32> to vector<15x128xf32>
    %326 = arith.mulf %325, %311 : vector<15x128xf32>
    %327 = vector.shape_cast %259 : vector<15x1xf32> to vector<15x1xf32>
    %328 = vector.broadcast %327 : vector<15x1xf32> to vector<15x128xf32>
    %329 = arith.mulf %328, %314 : vector<15x128xf32>
    %330 = arith.addf %326, %329 : vector<15x128xf32>
    %331 = arith.mulf %325, %319 : vector<15x128xf32>
    %332 = arith.mulf %259, %323 : vector<15x1xf32>
    %333 = vector.broadcast %332 : vector<15x1xf32> to vector<15x128xf32>
    %334 = arith.addf %331, %333 : vector<15x128xf32>
    %335 = vector.shape_cast %256 : vector<15x1xf32> to vector<15x1xf32>
    %336 = vector.broadcast %335 : vector<15x1xf32> to vector<15x128xf32>
    %337 = arith.mulf %336, %330 : vector<15x128xf32>
    %338 = vector.shape_cast %260 : vector<15x1xf32> to vector<15x1xf32>
    %339 = vector.broadcast %338 : vector<15x1xf32> to vector<15x128xf32>
    %340 = arith.mulf %339, %334 : vector<15x128xf32>
    %341 = arith.addf %337, %340 : vector<15x128xf32>
    %342 = vector.extract_strided_slice %341 {offsets = [6, 0], sizes = [3, 128], strides = [1, 1]} : vector<15x128xf32> to vector<3x128xf32>
    %343 = vector.extract_strided_slice %341 {offsets = [9, 0], sizes = [3, 128], strides = [1, 1]} : vector<15x128xf32> to vector<3x128xf32>
    %344 = vector.extract_strided_slice %341 {offsets = [12, 0], sizes = [3, 128], strides = [1, 1]} : vector<15x128xf32> to vector<3x128xf32>
    %345 = arith.subf %343, %344 : vector<3x128xf32>
    %346 = arith.mulf %342, %345 : vector<3x128xf32>
    %347 = arith.addf %343, %344 : vector<3x128xf32>
    %348 = arith.addf %346, %347 : vector<3x128xf32>
    %cst_26 = arith.constant 5.000000e-01 : f32
    %349 = vector.broadcast %cst_26 : f32 to vector<3x128xf32>
    %350 = arith.mulf %349, %348 : vector<3x128xf32>
    %351 = vector.extract_strided_slice %341 {offsets = [0, 0], sizes = [6, 128], strides = [1, 1]} : vector<15x128xf32> to vector<6x128xf32>
    %352 = tpu.concatenate %351, %350 in 0 : vector<6x128xf32>, vector<3x128xf32> -> vector<9x128xf32>
    %c4 = arith.constant 4 : index
    %c0_27 = arith.constant 0 : index
    %c0_28 = arith.constant 0 : index
    %353 = vector.load %arg2[%c4, %c0_27, %c0_28] : memref<7x16x9xf32, #tpu.memory_space<vmem>>, vector<1x16x9xf32>
    %354 = vector.shape_cast %353 : vector<1x16x9xf32> to vector<16x9xf32>
    %355 = vector.extract_strided_slice %354 {offsets = [0, 0], sizes = [15, 1], strides = [1, 1]} : vector<16x9xf32> to vector<15x1xf32>
    %356 = vector.extract_strided_slice %354 {offsets = [0, 1], sizes = [15, 1], strides = [1, 1]} : vector<16x9xf32> to vector<15x1xf32>
    %357 = vector.extract_strided_slice %354 {offsets = [0, 2], sizes = [15, 1], strides = [1, 1]} : vector<16x9xf32> to vector<15x1xf32>
    %358 = vector.extract_strided_slice %354 {offsets = [0, 3], sizes = [15, 1], strides = [1, 1]} : vector<16x9xf32> to vector<15x1xf32>
    %359 = vector.extract_strided_slice %354 {offsets = [0, 4], sizes = [15, 1], strides = [1, 1]} : vector<16x9xf32> to vector<15x1xf32>
    %360 = vector.extract_strided_slice %354 {offsets = [0, 5], sizes = [15, 1], strides = [1, 1]} : vector<16x9xf32> to vector<15x1xf32>
    %361 = vector.extract_strided_slice %354 {offsets = [0, 6], sizes = [15, 1], strides = [1, 1]} : vector<16x9xf32> to vector<15x1xf32>
    %362 = vector.extract_strided_slice %354 {offsets = [0, 7], sizes = [15, 1], strides = [1, 1]} : vector<16x9xf32> to vector<15x1xf32>
    %363 = vector.extract_strided_slice %354 {offsets = [0, 8], sizes = [15, 1], strides = [1, 1]} : vector<16x9xf32> to vector<15x1xf32>
    %364 = vector.extract_strided_slice %352 {offsets = [0, 0], sizes = [1, 128], strides = [1, 1]} : vector<9x128xf32> to vector<1x128xf32>
    %365 = vector.extract_strided_slice %352 {offsets = [1, 0], sizes = [1, 128], strides = [1, 1]} : vector<9x128xf32> to vector<1x128xf32>
    %366 = vector.extract_strided_slice %352 {offsets = [2, 0], sizes = [1, 128], strides = [1, 1]} : vector<9x128xf32> to vector<1x128xf32>
    %367 = vector.extract_strided_slice %352 {offsets = [3, 0], sizes = [1, 128], strides = [1, 1]} : vector<9x128xf32> to vector<1x128xf32>
    %368 = vector.extract_strided_slice %352 {offsets = [4, 0], sizes = [1, 128], strides = [1, 1]} : vector<9x128xf32> to vector<1x128xf32>
    %369 = vector.extract_strided_slice %352 {offsets = [5, 0], sizes = [1, 128], strides = [1, 1]} : vector<9x128xf32> to vector<1x128xf32>
    %370 = vector.extract_strided_slice %352 {offsets = [6, 0], sizes = [1, 128], strides = [1, 1]} : vector<9x128xf32> to vector<1x128xf32>
    %371 = vector.extract_strided_slice %352 {offsets = [7, 0], sizes = [1, 128], strides = [1, 1]} : vector<9x128xf32> to vector<1x128xf32>
    %372 = vector.extract_strided_slice %352 {offsets = [8, 0], sizes = [1, 128], strides = [1, 1]} : vector<9x128xf32> to vector<1x128xf32>
    %373 = vector.shape_cast %355 : vector<15x1xf32> to vector<15x1xf32>
    %374 = vector.broadcast %373 : vector<15x1xf32> to vector<15x128xf32>
    %375 = vector.broadcast %364 : vector<1x128xf32> to vector<15x128xf32>
    %376 = arith.mulf %374, %375 : vector<15x128xf32>
    %377 = vector.shape_cast %359 : vector<15x1xf32> to vector<15x1xf32>
    %378 = vector.broadcast %377 : vector<15x1xf32> to vector<15x128xf32>
    %379 = vector.broadcast %365 : vector<1x128xf32> to vector<15x128xf32>
    %380 = arith.mulf %378, %379 : vector<15x128xf32>
    %381 = arith.addf %376, %380 : vector<15x128xf32>
    %382 = vector.broadcast %366 : vector<1x128xf32> to vector<15x128xf32>
    %383 = arith.mulf %374, %382 : vector<15x128xf32>
    %384 = vector.broadcast %367 : vector<1x128xf32> to vector<15x128xf32>
    %385 = arith.mulf %378, %384 : vector<15x128xf32>
    %386 = arith.addf %383, %385 : vector<15x128xf32>
    %387 = vector.broadcast %368 : vector<1x128xf32> to vector<15x128xf32>
    %388 = arith.mulf %374, %387 : vector<15x128xf32>
    %389 = vector.broadcast %369 : vector<1x128xf32> to vector<15x128xf32>
    %390 = arith.mulf %378, %389 : vector<15x128xf32>
    %391 = arith.addf %388, %390 : vector<15x128xf32>
    %392 = vector.broadcast %370 : vector<1x128xf32> to vector<15x128xf32>
    %393 = arith.mulf %374, %392 : vector<15x128xf32>
    %394 = vector.broadcast %371 : vector<1x128xf32> to vector<15x128xf32>
    %395 = arith.mulf %378, %394 : vector<15x128xf32>
    %396 = arith.addf %393, %395 : vector<15x128xf32>
    %397 = vector.broadcast %372 : vector<1x128xf32> to vector<15x128xf32>
    %398 = arith.mulf %374, %397 : vector<15x128xf32>
    %cst_29 = arith.constant 0.000000e+00 : f32
    %399 = vector.broadcast %cst_29 : f32 to vector<15x1xf32>
    %400 = arith.subf %399, %359 : vector<15x1xf32>
    %401 = vector.broadcast %400 : vector<15x1xf32> to vector<15x128xf32>
    %402 = arith.addf %398, %401 : vector<15x128xf32>
    %cst_30 = arith.constant 0.000000e+00 : f32
    %403 = vector.broadcast %cst_30 : f32 to vector<15x1xf32>
    %404 = arith.subf %403, %355 : vector<15x1xf32>
    %405 = arith.mulf %359, %363 : vector<15x1xf32>
    %406 = arith.addf %404, %405 : vector<15x1xf32>
    %407 = vector.shape_cast %356 : vector<15x1xf32> to vector<15x1xf32>
    %408 = vector.broadcast %407 : vector<15x1xf32> to vector<15x128xf32>
    %409 = arith.mulf %408, %381 : vector<15x128xf32>
    %410 = vector.shape_cast %360 : vector<15x1xf32> to vector<15x1xf32>
    %411 = vector.broadcast %410 : vector<15x1xf32> to vector<15x128xf32>
    %412 = arith.mulf %411, %386 : vector<15x128xf32>
    %413 = arith.addf %409, %412 : vector<15x128xf32>
    %414 = arith.mulf %408, %391 : vector<15x128xf32>
    %415 = arith.mulf %411, %396 : vector<15x128xf32>
    %416 = arith.addf %414, %415 : vector<15x128xf32>
    %417 = arith.mulf %408, %402 : vector<15x128xf32>
    %cst_31 = arith.constant 0.000000e+00 : f32
    %418 = vector.broadcast %cst_31 : f32 to vector<15x1xf32>
    %419 = arith.subf %418, %360 : vector<15x1xf32>
    %420 = vector.broadcast %419 : vector<15x1xf32> to vector<15x128xf32>
    %421 = arith.addf %417, %420 : vector<15x128xf32>
    %cst_32 = arith.constant 0.000000e+00 : f32
    %422 = vector.broadcast %cst_32 : f32 to vector<15x1xf32>
    %423 = arith.subf %422, %356 : vector<15x1xf32>
    %424 = arith.mulf %360, %406 : vector<15x1xf32>
    %425 = arith.addf %423, %424 : vector<15x1xf32>
    %426 = vector.shape_cast %357 : vector<15x1xf32> to vector<15x1xf32>
    %427 = vector.broadcast %426 : vector<15x1xf32> to vector<15x128xf32>
    %428 = arith.mulf %427, %413 : vector<15x128xf32>
    %429 = vector.shape_cast %361 : vector<15x1xf32> to vector<15x1xf32>
    %430 = vector.broadcast %429 : vector<15x1xf32> to vector<15x128xf32>
    %431 = arith.mulf %430, %416 : vector<15x128xf32>
    %432 = arith.addf %428, %431 : vector<15x128xf32>
    %433 = arith.mulf %427, %421 : vector<15x128xf32>
    %434 = arith.mulf %361, %425 : vector<15x1xf32>
    %435 = vector.broadcast %434 : vector<15x1xf32> to vector<15x128xf32>
    %436 = arith.addf %433, %435 : vector<15x128xf32>
    %437 = vector.shape_cast %358 : vector<15x1xf32> to vector<15x1xf32>
    %438 = vector.broadcast %437 : vector<15x1xf32> to vector<15x128xf32>
    %439 = arith.mulf %438, %432 : vector<15x128xf32>
    %440 = vector.shape_cast %362 : vector<15x1xf32> to vector<15x1xf32>
    %441 = vector.broadcast %440 : vector<15x1xf32> to vector<15x128xf32>
    %442 = arith.mulf %441, %436 : vector<15x128xf32>
    %443 = arith.addf %439, %442 : vector<15x128xf32>
    %444 = vector.extract_strided_slice %443 {offsets = [6, 0], sizes = [3, 128], strides = [1, 1]} : vector<15x128xf32> to vector<3x128xf32>
    %445 = vector.extract_strided_slice %443 {offsets = [9, 0], sizes = [3, 128], strides = [1, 1]} : vector<15x128xf32> to vector<3x128xf32>
    %446 = vector.extract_strided_slice %443 {offsets = [12, 0], sizes = [3, 128], strides = [1, 1]} : vector<15x128xf32> to vector<3x128xf32>
    %447 = arith.subf %445, %446 : vector<3x128xf32>
    %448 = arith.mulf %444, %447 : vector<3x128xf32>
    %449 = arith.addf %445, %446 : vector<3x128xf32>
    %450 = arith.addf %448, %449 : vector<3x128xf32>
    %cst_33 = arith.constant 5.000000e-01 : f32
    %451 = vector.broadcast %cst_33 : f32 to vector<3x128xf32>
    %452 = arith.mulf %451, %450 : vector<3x128xf32>
    %453 = vector.extract_strided_slice %443 {offsets = [0, 0], sizes = [6, 128], strides = [1, 1]} : vector<15x128xf32> to vector<6x128xf32>
    %454 = tpu.concatenate %453, %452 in 0 : vector<6x128xf32>, vector<3x128xf32> -> vector<9x128xf32>
    %c5 = arith.constant 5 : index
    %c0_34 = arith.constant 0 : index
    %c0_35 = arith.constant 0 : index
    %455 = vector.load %arg2[%c5, %c0_34, %c0_35] : memref<7x16x9xf32, #tpu.memory_space<vmem>>, vector<1x16x9xf32>
    %456 = vector.shape_cast %455 : vector<1x16x9xf32> to vector<16x9xf32>
    %457 = vector.extract_strided_slice %456 {offsets = [0, 0], sizes = [15, 1], strides = [1, 1]} : vector<16x9xf32> to vector<15x1xf32>
    %458 = vector.extract_strided_slice %456 {offsets = [0, 1], sizes = [15, 1], strides = [1, 1]} : vector<16x9xf32> to vector<15x1xf32>
    %459 = vector.extract_strided_slice %456 {offsets = [0, 2], sizes = [15, 1], strides = [1, 1]} : vector<16x9xf32> to vector<15x1xf32>
    %460 = vector.extract_strided_slice %456 {offsets = [0, 3], sizes = [15, 1], strides = [1, 1]} : vector<16x9xf32> to vector<15x1xf32>
    %461 = vector.extract_strided_slice %456 {offsets = [0, 4], sizes = [15, 1], strides = [1, 1]} : vector<16x9xf32> to vector<15x1xf32>
    %462 = vector.extract_strided_slice %456 {offsets = [0, 5], sizes = [15, 1], strides = [1, 1]} : vector<16x9xf32> to vector<15x1xf32>
    %463 = vector.extract_strided_slice %456 {offsets = [0, 6], sizes = [15, 1], strides = [1, 1]} : vector<16x9xf32> to vector<15x1xf32>
    %464 = vector.extract_strided_slice %456 {offsets = [0, 7], sizes = [15, 1], strides = [1, 1]} : vector<16x9xf32> to vector<15x1xf32>
    %465 = vector.extract_strided_slice %456 {offsets = [0, 8], sizes = [15, 1], strides = [1, 1]} : vector<16x9xf32> to vector<15x1xf32>
    %466 = vector.extract_strided_slice %454 {offsets = [0, 0], sizes = [1, 128], strides = [1, 1]} : vector<9x128xf32> to vector<1x128xf32>
    %467 = vector.extract_strided_slice %454 {offsets = [1, 0], sizes = [1, 128], strides = [1, 1]} : vector<9x128xf32> to vector<1x128xf32>
    %468 = vector.extract_strided_slice %454 {offsets = [2, 0], sizes = [1, 128], strides = [1, 1]} : vector<9x128xf32> to vector<1x128xf32>
    %469 = vector.extract_strided_slice %454 {offsets = [3, 0], sizes = [1, 128], strides = [1, 1]} : vector<9x128xf32> to vector<1x128xf32>
    %470 = vector.extract_strided_slice %454 {offsets = [4, 0], sizes = [1, 128], strides = [1, 1]} : vector<9x128xf32> to vector<1x128xf32>
    %471 = vector.extract_strided_slice %454 {offsets = [5, 0], sizes = [1, 128], strides = [1, 1]} : vector<9x128xf32> to vector<1x128xf32>
    %472 = vector.extract_strided_slice %454 {offsets = [6, 0], sizes = [1, 128], strides = [1, 1]} : vector<9x128xf32> to vector<1x128xf32>
    %473 = vector.extract_strided_slice %454 {offsets = [7, 0], sizes = [1, 128], strides = [1, 1]} : vector<9x128xf32> to vector<1x128xf32>
    %474 = vector.extract_strided_slice %454 {offsets = [8, 0], sizes = [1, 128], strides = [1, 1]} : vector<9x128xf32> to vector<1x128xf32>
    %475 = vector.shape_cast %457 : vector<15x1xf32> to vector<15x1xf32>
    %476 = vector.broadcast %475 : vector<15x1xf32> to vector<15x128xf32>
    %477 = vector.broadcast %466 : vector<1x128xf32> to vector<15x128xf32>
    %478 = arith.mulf %476, %477 : vector<15x128xf32>
    %479 = vector.shape_cast %461 : vector<15x1xf32> to vector<15x1xf32>
    %480 = vector.broadcast %479 : vector<15x1xf32> to vector<15x128xf32>
    %481 = vector.broadcast %467 : vector<1x128xf32> to vector<15x128xf32>
    %482 = arith.mulf %480, %481 : vector<15x128xf32>
    %483 = arith.addf %478, %482 : vector<15x128xf32>
    %484 = vector.broadcast %468 : vector<1x128xf32> to vector<15x128xf32>
    %485 = arith.mulf %476, %484 : vector<15x128xf32>
    %486 = vector.broadcast %469 : vector<1x128xf32> to vector<15x128xf32>
    %487 = arith.mulf %480, %486 : vector<15x128xf32>
    %488 = arith.addf %485, %487 : vector<15x128xf32>
    %489 = vector.broadcast %470 : vector<1x128xf32> to vector<15x128xf32>
    %490 = arith.mulf %476, %489 : vector<15x128xf32>
    %491 = vector.broadcast %471 : vector<1x128xf32> to vector<15x128xf32>
    %492 = arith.mulf %480, %491 : vector<15x128xf32>
    %493 = arith.addf %490, %492 : vector<15x128xf32>
    %494 = vector.broadcast %472 : vector<1x128xf32> to vector<15x128xf32>
    %495 = arith.mulf %476, %494 : vector<15x128xf32>
    %496 = vector.broadcast %473 : vector<1x128xf32> to vector<15x128xf32>
    %497 = arith.mulf %480, %496 : vector<15x128xf32>
    %498 = arith.addf %495, %497 : vector<15x128xf32>
    %499 = vector.broadcast %474 : vector<1x128xf32> to vector<15x128xf32>
    %500 = arith.mulf %476, %499 : vector<15x128xf32>
    %cst_36 = arith.constant 0.000000e+00 : f32
    %501 = vector.broadcast %cst_36 : f32 to vector<15x1xf32>
    %502 = arith.subf %501, %461 : vector<15x1xf32>
    %503 = vector.broadcast %502 : vector<15x1xf32> to vector<15x128xf32>
    %504 = arith.addf %500, %503 : vector<15x128xf32>
    %cst_37 = arith.constant 0.000000e+00 : f32
    %505 = vector.broadcast %cst_37 : f32 to vector<15x1xf32>
    %506 = arith.subf %505, %457 : vector<15x1xf32>
    %507 = arith.mulf %461, %465 : vector<15x1xf32>
    %508 = arith.addf %506, %507 : vector<15x1xf32>
    %509 = vector.shape_cast %458 : vector<15x1xf32> to vector<15x1xf32>
    %510 = vector.broadcast %509 : vector<15x1xf32> to vector<15x128xf32>
    %511 = arith.mulf %510, %483 : vector<15x128xf32>
    %512 = vector.shape_cast %462 : vector<15x1xf32> to vector<15x1xf32>
    %513 = vector.broadcast %512 : vector<15x1xf32> to vector<15x128xf32>
    %514 = arith.mulf %513, %488 : vector<15x128xf32>
    %515 = arith.addf %511, %514 : vector<15x128xf32>
    %516 = arith.mulf %510, %493 : vector<15x128xf32>
    %517 = arith.mulf %513, %498 : vector<15x128xf32>
    %518 = arith.addf %516, %517 : vector<15x128xf32>
    %519 = arith.mulf %510, %504 : vector<15x128xf32>
    %cst_38 = arith.constant 0.000000e+00 : f32
    %520 = vector.broadcast %cst_38 : f32 to vector<15x1xf32>
    %521 = arith.subf %520, %462 : vector<15x1xf32>
    %522 = vector.broadcast %521 : vector<15x1xf32> to vector<15x128xf32>
    %523 = arith.addf %519, %522 : vector<15x128xf32>
    %cst_39 = arith.constant 0.000000e+00 : f32
    %524 = vector.broadcast %cst_39 : f32 to vector<15x1xf32>
    %525 = arith.subf %524, %458 : vector<15x1xf32>
    %526 = arith.mulf %462, %508 : vector<15x1xf32>
    %527 = arith.addf %525, %526 : vector<15x1xf32>
    %528 = vector.shape_cast %459 : vector<15x1xf32> to vector<15x1xf32>
    %529 = vector.broadcast %528 : vector<15x1xf32> to vector<15x128xf32>
    %530 = arith.mulf %529, %515 : vector<15x128xf32>
    %531 = vector.shape_cast %463 : vector<15x1xf32> to vector<15x1xf32>
    %532 = vector.broadcast %531 : vector<15x1xf32> to vector<15x128xf32>
    %533 = arith.mulf %532, %518 : vector<15x128xf32>
    %534 = arith.addf %530, %533 : vector<15x128xf32>
    %535 = arith.mulf %529, %523 : vector<15x128xf32>
    %536 = arith.mulf %463, %527 : vector<15x1xf32>
    %537 = vector.broadcast %536 : vector<15x1xf32> to vector<15x128xf32>
    %538 = arith.addf %535, %537 : vector<15x128xf32>
    %539 = vector.shape_cast %460 : vector<15x1xf32> to vector<15x1xf32>
    %540 = vector.broadcast %539 : vector<15x1xf32> to vector<15x128xf32>
    %541 = arith.mulf %540, %534 : vector<15x128xf32>
    %542 = vector.shape_cast %464 : vector<15x1xf32> to vector<15x1xf32>
    %543 = vector.broadcast %542 : vector<15x1xf32> to vector<15x128xf32>
    %544 = arith.mulf %543, %538 : vector<15x128xf32>
    %545 = arith.addf %541, %544 : vector<15x128xf32>
    %546 = vector.extract_strided_slice %545 {offsets = [6, 0], sizes = [3, 128], strides = [1, 1]} : vector<15x128xf32> to vector<3x128xf32>
    %547 = vector.extract_strided_slice %545 {offsets = [9, 0], sizes = [3, 128], strides = [1, 1]} : vector<15x128xf32> to vector<3x128xf32>
    %548 = vector.extract_strided_slice %545 {offsets = [12, 0], sizes = [3, 128], strides = [1, 1]} : vector<15x128xf32> to vector<3x128xf32>
    %549 = arith.subf %547, %548 : vector<3x128xf32>
    %550 = arith.mulf %546, %549 : vector<3x128xf32>
    %551 = arith.addf %547, %548 : vector<3x128xf32>
    %552 = arith.addf %550, %551 : vector<3x128xf32>
    %cst_40 = arith.constant 5.000000e-01 : f32
    %553 = vector.broadcast %cst_40 : f32 to vector<3x128xf32>
    %554 = arith.mulf %553, %552 : vector<3x128xf32>
    %555 = vector.extract_strided_slice %545 {offsets = [0, 0], sizes = [6, 128], strides = [1, 1]} : vector<15x128xf32> to vector<6x128xf32>
    %556 = tpu.concatenate %555, %554 in 0 : vector<6x128xf32>, vector<3x128xf32> -> vector<9x128xf32>
    %c6 = arith.constant 6 : index
    %c0_41 = arith.constant 0 : index
    %c0_42 = arith.constant 0 : index
    %557 = vector.load %arg2[%c6, %c0_41, %c0_42] : memref<7x16x9xf32, #tpu.memory_space<vmem>>, vector<1x16x9xf32>
    %558 = vector.shape_cast %557 : vector<1x16x9xf32> to vector<16x9xf32>
    %559 = vector.extract_strided_slice %558 {offsets = [0, 0], sizes = [9, 1], strides = [1, 1]} : vector<16x9xf32> to vector<9x1xf32>
    %560 = vector.extract_strided_slice %558 {offsets = [0, 1], sizes = [9, 1], strides = [1, 1]} : vector<16x9xf32> to vector<9x1xf32>
    %561 = vector.extract_strided_slice %558 {offsets = [0, 2], sizes = [9, 1], strides = [1, 1]} : vector<16x9xf32> to vector<9x1xf32>
    %562 = vector.extract_strided_slice %558 {offsets = [0, 3], sizes = [9, 1], strides = [1, 1]} : vector<16x9xf32> to vector<9x1xf32>
    %563 = vector.extract_strided_slice %558 {offsets = [0, 4], sizes = [9, 1], strides = [1, 1]} : vector<16x9xf32> to vector<9x1xf32>
    %564 = vector.extract_strided_slice %558 {offsets = [0, 5], sizes = [9, 1], strides = [1, 1]} : vector<16x9xf32> to vector<9x1xf32>
    %565 = vector.extract_strided_slice %558 {offsets = [0, 6], sizes = [9, 1], strides = [1, 1]} : vector<16x9xf32> to vector<9x1xf32>
    %566 = vector.extract_strided_slice %558 {offsets = [0, 7], sizes = [9, 1], strides = [1, 1]} : vector<16x9xf32> to vector<9x1xf32>
    %567 = vector.extract_strided_slice %558 {offsets = [0, 8], sizes = [9, 1], strides = [1, 1]} : vector<16x9xf32> to vector<9x1xf32>
    %568 = vector.extract_strided_slice %556 {offsets = [0, 0], sizes = [1, 128], strides = [1, 1]} : vector<9x128xf32> to vector<1x128xf32>
    %569 = vector.extract_strided_slice %556 {offsets = [1, 0], sizes = [1, 128], strides = [1, 1]} : vector<9x128xf32> to vector<1x128xf32>
    %570 = vector.extract_strided_slice %556 {offsets = [2, 0], sizes = [1, 128], strides = [1, 1]} : vector<9x128xf32> to vector<1x128xf32>
    %571 = vector.extract_strided_slice %556 {offsets = [3, 0], sizes = [1, 128], strides = [1, 1]} : vector<9x128xf32> to vector<1x128xf32>
    %572 = vector.extract_strided_slice %556 {offsets = [4, 0], sizes = [1, 128], strides = [1, 1]} : vector<9x128xf32> to vector<1x128xf32>
    %573 = vector.extract_strided_slice %556 {offsets = [5, 0], sizes = [1, 128], strides = [1, 1]} : vector<9x128xf32> to vector<1x128xf32>
    %574 = vector.extract_strided_slice %556 {offsets = [6, 0], sizes = [1, 128], strides = [1, 1]} : vector<9x128xf32> to vector<1x128xf32>
    %575 = vector.extract_strided_slice %556 {offsets = [7, 0], sizes = [1, 128], strides = [1, 1]} : vector<9x128xf32> to vector<1x128xf32>
    %576 = vector.extract_strided_slice %556 {offsets = [8, 0], sizes = [1, 128], strides = [1, 1]} : vector<9x128xf32> to vector<1x128xf32>
    %577 = vector.shape_cast %559 : vector<9x1xf32> to vector<9x1xf32>
    %578 = vector.broadcast %577 : vector<9x1xf32> to vector<9x128xf32>
    %579 = vector.broadcast %568 : vector<1x128xf32> to vector<9x128xf32>
    %580 = arith.mulf %578, %579 : vector<9x128xf32>
    %581 = vector.shape_cast %563 : vector<9x1xf32> to vector<9x1xf32>
    %582 = vector.broadcast %581 : vector<9x1xf32> to vector<9x128xf32>
    %583 = vector.broadcast %569 : vector<1x128xf32> to vector<9x128xf32>
    %584 = arith.mulf %582, %583 : vector<9x128xf32>
    %585 = arith.addf %580, %584 : vector<9x128xf32>
    %586 = vector.broadcast %570 : vector<1x128xf32> to vector<9x128xf32>
    %587 = arith.mulf %578, %586 : vector<9x128xf32>
    %588 = vector.broadcast %571 : vector<1x128xf32> to vector<9x128xf32>
    %589 = arith.mulf %582, %588 : vector<9x128xf32>
    %590 = arith.addf %587, %589 : vector<9x128xf32>
    %591 = vector.broadcast %572 : vector<1x128xf32> to vector<9x128xf32>
    %592 = arith.mulf %578, %591 : vector<9x128xf32>
    %593 = vector.broadcast %573 : vector<1x128xf32> to vector<9x128xf32>
    %594 = arith.mulf %582, %593 : vector<9x128xf32>
    %595 = arith.addf %592, %594 : vector<9x128xf32>
    %596 = vector.broadcast %574 : vector<1x128xf32> to vector<9x128xf32>
    %597 = arith.mulf %578, %596 : vector<9x128xf32>
    %598 = vector.broadcast %575 : vector<1x128xf32> to vector<9x128xf32>
    %599 = arith.mulf %582, %598 : vector<9x128xf32>
    %600 = arith.addf %597, %599 : vector<9x128xf32>
    %601 = vector.broadcast %576 : vector<1x128xf32> to vector<9x128xf32>
    %602 = arith.mulf %578, %601 : vector<9x128xf32>
    %cst_43 = arith.constant 0.000000e+00 : f32
    %603 = vector.broadcast %cst_43 : f32 to vector<9x1xf32>
    %604 = arith.subf %603, %563 : vector<9x1xf32>
    %605 = vector.broadcast %604 : vector<9x1xf32> to vector<9x128xf32>
    %606 = arith.addf %602, %605 : vector<9x128xf32>
    %cst_44 = arith.constant 0.000000e+00 : f32
    %607 = vector.broadcast %cst_44 : f32 to vector<9x1xf32>
    %608 = arith.subf %607, %559 : vector<9x1xf32>
    %609 = arith.mulf %563, %567 : vector<9x1xf32>
    %610 = arith.addf %608, %609 : vector<9x1xf32>
    %611 = vector.shape_cast %560 : vector<9x1xf32> to vector<9x1xf32>
    %612 = vector.broadcast %611 : vector<9x1xf32> to vector<9x128xf32>
    %613 = arith.mulf %612, %585 : vector<9x128xf32>
    %614 = vector.shape_cast %564 : vector<9x1xf32> to vector<9x1xf32>
    %615 = vector.broadcast %614 : vector<9x1xf32> to vector<9x128xf32>
    %616 = arith.mulf %615, %590 : vector<9x128xf32>
    %617 = arith.addf %613, %616 : vector<9x128xf32>
    %618 = arith.mulf %612, %595 : vector<9x128xf32>
    %619 = arith.mulf %615, %600 : vector<9x128xf32>
    %620 = arith.addf %618, %619 : vector<9x128xf32>
    %621 = arith.mulf %612, %606 : vector<9x128xf32>
    %cst_45 = arith.constant 0.000000e+00 : f32
    %622 = vector.broadcast %cst_45 : f32 to vector<9x1xf32>
    %623 = arith.subf %622, %564 : vector<9x1xf32>
    %624 = vector.broadcast %623 : vector<9x1xf32> to vector<9x128xf32>
    %625 = arith.addf %621, %624 : vector<9x128xf32>
    %cst_46 = arith.constant 0.000000e+00 : f32
    %626 = vector.broadcast %cst_46 : f32 to vector<9x1xf32>
    %627 = arith.subf %626, %560 : vector<9x1xf32>
    %628 = arith.mulf %564, %610 : vector<9x1xf32>
    %629 = arith.addf %627, %628 : vector<9x1xf32>
    %630 = vector.shape_cast %561 : vector<9x1xf32> to vector<9x1xf32>
    %631 = vector.broadcast %630 : vector<9x1xf32> to vector<9x128xf32>
    %632 = arith.mulf %631, %617 : vector<9x128xf32>
    %633 = vector.shape_cast %565 : vector<9x1xf32> to vector<9x1xf32>
    %634 = vector.broadcast %633 : vector<9x1xf32> to vector<9x128xf32>
    %635 = arith.mulf %634, %620 : vector<9x128xf32>
    %636 = arith.addf %632, %635 : vector<9x128xf32>
    %637 = arith.mulf %631, %625 : vector<9x128xf32>
    %638 = arith.mulf %565, %629 : vector<9x1xf32>
    %639 = vector.broadcast %638 : vector<9x1xf32> to vector<9x128xf32>
    %640 = arith.addf %637, %639 : vector<9x128xf32>
    %641 = vector.shape_cast %562 : vector<9x1xf32> to vector<9x1xf32>
    %642 = vector.broadcast %641 : vector<9x1xf32> to vector<9x128xf32>
    %643 = arith.mulf %642, %636 : vector<9x128xf32>
    %644 = vector.shape_cast %566 : vector<9x1xf32> to vector<9x1xf32>
    %645 = vector.broadcast %644 : vector<9x1xf32> to vector<9x128xf32>
    %646 = arith.mulf %645, %640 : vector<9x128xf32>
    %647 = arith.addf %643, %646 : vector<9x128xf32>
    %648 = vector.extract_strided_slice %647 {offsets = [0, 0], sizes = [3, 128], strides = [1, 1]} : vector<9x128xf32> to vector<3x128xf32>
    %649 = vector.extract_strided_slice %647 {offsets = [3, 0], sizes = [3, 128], strides = [1, 1]} : vector<9x128xf32> to vector<3x128xf32>
    %650 = vector.extract_strided_slice %647 {offsets = [6, 0], sizes = [3, 128], strides = [1, 1]} : vector<9x128xf32> to vector<3x128xf32>
    %651 = arith.subf %649, %650 : vector<3x128xf32>
    %652 = arith.mulf %648, %651 : vector<3x128xf32>
    %653 = arith.addf %649, %650 : vector<3x128xf32>
    %654 = arith.addf %652, %653 : vector<3x128xf32>
    %cst_47 = arith.constant 5.000000e-01 : f32
    %655 = vector.broadcast %cst_47 : f32 to vector<3x128xf32>
    %656 = arith.mulf %655, %654 : vector<3x128xf32>
    %c0_48 = arith.constant 0 : index
    %c0_49 = arith.constant 0 : index
    %657 = vector.load %arg3[%c0_48, %c0_49] : memref<3x128xf32, #tpu.memory_space<vmem>>, vector<3x128xf32>
    tpu.vector_store %arg3[%c0_48, %c0_49], %656 {strides = array<i32>} : memref<3x128xf32, #tpu.memory_space<vmem>>, vector<3x128xf32>,
    return
  }
  func.func @transform_0(%arg0: i32) -> (i32, i32) {
    %c0_i32 = arith.constant 0 : i32
    %c0_i32_0 = arith.constant 0 : i32
    return %c0_i32, %arg0 : i32, i32
  }
  func.func @transform_1(%arg0: i32) -> (i32, i32, i32) {
    %c0_i32 = arith.constant 0 : i32
    %c0_i32_0 = arith.constant 0 : i32
    %c0_i32_1 = arith.constant 0 : i32
    %c0_i32_2 = arith.constant 0 : i32
    return %c0_i32, %c0_i32_0, %c0_i32_1 : i32, i32, i32
  }
  func.func @transform_2(%arg0: i32) -> (i32, i32) {
    %c0_i32 = arith.constant 0 : i32
    %c0_i32_0 = arith.constant 0 : i32
    return %c0_i32, %arg0 : i32, i32
  }
}

</mosaic_0001>

<llo_original>
// kernel: _forward_batched.1
$region0: #{_forward_batched.1}
  #allocation0 [shape = 'u32[]', space=smem, size = 0x4, offset = 0x4, fixed_abs, tag = 'smem constant byte address 0x4 - core index']
  #allocation1 [shape = 'u32[72,128]{1,0:T(1,128)}', space=vmem, size = 0x9000, scoped, tag = 'internal scratch']
  %s0 = inlined_call_operand.vmem [shape: f32[4,256], index: 0, kind: input, shape index: {}]
  %s1 = inlined_call_operand.vmem [shape: f32[7,16,9], index: 1, kind: input, shape index: {}]
  %s2 = inlined_call_operand.hbm [shape: f32[3,256], index: 2, kind: output, shape index: {}]
  %s3 = sld [smem:[#allocation0]]
  $region41: #{_forward_batched.1} parent=0
    _
  %s5 = ssub.s32 1, %s3
  %s6 = scalar_select 0, %s5, %s3
  $region1: #{_forward_batched.1} parent=0
    #allocation2 [shape = 'u8[4096]{0}', space=vmem, size = 0x1000, scoped, tag = 'output window, operand 0']
    #allocation3 [shape = 's32[2]{0}', space=sflag, size = 0x8, scoped, tag = 'scoped memory for _forward_batched.1']
    %7 = vsyncpa [#allocation3], 0
    %s8 = scalar_lea.sflag [#allocation3], 1
    %9 = vsyncpa %s8, 0
    loop: start=0, step=1, limit=4
    $region2: #{_forward_batched.1} parent=1 // loop_pre_header
      _
    $region3: #{_forward_batched.1} parent=1 // loop_header
      %s11 = sphi 0, %s15
      %p12 = scmp.ge.s32.totalorder %s11, 4
      %s21 = sphi 0, %s23
      %s24 = sphi 0, %s21
      %s25 = sphi 0, %s24
      %s41 = sphi 0, %s25
      %s45 = sphi 0, %s45
      %s47 = sphi 0, %s45
      %s48 = sphi 0, %s47
      %s62 = sphi 0, %s48
      %s68 = sphi 0, %s70
      %s71 = sphi 0, %s68
      %s72 = sphi 0, %s71
      %s88 = sphi 0, %s72
    $region4: #{_forward_batched.1} parent=1 // loop_header_branch
      %14 = sbr.rel (%p12) target = $region8
    $region5: #{_forward_batched.1} parent=1 // loop_body
      %s16 = ssub.s32 %s11, 1
      %s17 = ssub.s32 %s11, 2
      %s18 = sadd.s32 %s11, 1
      %s19 = ssub.s32 %s11, %s18
      %p20 = scmp.eq.s32.totalorder %s19, 0
      %s22 = sadd.s32 %s21, 1
      %s23 = scalar_select %p20, %s21, %s22
      %p26 = pneg %p20
      %p27 = scmp.eq.s32.totalorder %s11, 1
      %p28 = por %p26, %p27
      %p29 = scmp.ne.s32.totalorder %s21, %s24
      %p30 = scmp.eq.s32.totalorder %s11, 0
      %p31 = por %p29, %p30
      %p32 = scmp.ne.s32.totalorder %s21, %s24
      %p33 = scmp.eq.s32.totalorder %s16, 1
      %p34 = por %p32, %p33
      %p35 = scmp.ne.s32.totalorder %s24, %s25
      %p36 = scmp.eq.s32.totalorder %s16, 0
      %p37 = por %p35, %p36
      %p38 = scmp.ne.s32.totalorder %s24, %s25
      %p39 = scmp.eq.s32.totalorder %s17, 1
      %p40 = por %p38, %p39
      %p42 = scmp.ne.s32.totalorder %s25, %s41
      %p43 = scmp.eq.s32.totalorder %s17, 0
      %p44 = por %p42, %p43
      %s46 = sadd.s32 %s45, 1
      %p49 = scmp.eq.s32.totalorder %s11, 1
      %p50 = scmp.ne.s32.totalorder %s45, %s47
      %p51 = scmp.eq.s32.totalorder %s11, 0
      %p52 = por %p50, %p51
      %p53 = scmp.ne.s32.totalorder %s45, %s47
      %p54 = scmp.eq.s32.totalorder %s16, 1
      %p55 = por %p53, %p54
      %p56 = scmp.ne.s32.totalorder %s47, %s48
      %p57 = scmp.eq.s32.totalorder %s16, 0
      %p58 = por %p56, %p57
      %p59 = scmp.ne.s32.totalorder %s47, %s48
      %p60 = scmp.eq.s32.totalorder %s17, 1
      %p61 = por %p59, %p60
      %p63 = scmp.ne.s32.totalorder %s48, %s62
      %p64 = scmp.eq.s32.totalorder %s17, 0
      %p65 = por %p63, %p64
      %s66 = ssub.s32 %s11, %s18
      %p67 = scmp.eq.s32.totalorder %s66, 0
      %s69 = sadd.s32 %s68, 1
      %s70 = scalar_select %p67, %s68, %s69
      %p73 = pneg %p67
      %p74 = scmp.eq.s32.totalorder %s11, 1
      %p75 = por %p73, %p74
      %p76 = scmp.ne.s32.totalorder %s68, %s71
      %p77 = scmp.eq.s32.totalorder %s11, 0
      %p78 = por %p76, %p77
      %p79 = scmp.ne.s32.totalorder %s68, %s71
      %p80 = scmp.eq.s32.totalorder %s16, 1
      %p81 = por %p79, %p80
      %p82 = scmp.ne.s32.totalorder %s71, %s72
      %p83 = scmp.eq.s32.totalorder %s16, 0
      %p84 = por %p82, %p83
      %p85 = scmp.ne.s32.totalorder %s71, %s72
      %p86 = scmp.eq.s32.totalorder %s17, 1
      %p87 = por %p85, %p86
      %p89 = scmp.ne.s32.totalorder %s72, %s88
      %p90 = scmp.eq.s32.totalorder %s17, 0
      %p91 = por %p89, %p90
      %p92 = scmp.le.s32.totalorder 1, %s11
      %p93 = scmp.lt.s32.totalorder %s11, 3
      %p94 = pnand %p92, %p93
      %p95 = pneg %p94
      // Predicated region
      $region9: #{_forward_batched.1} parent=5 // pred_check
        _
      $region10: #{_forward_batched.1} parent=5 // pred_check_branch
        %97 = sbr.rel (%p94) target = $region12
      $region11: #{_forward_batched.1} parent=5 // pred_region
        %s98 = ssub.s32 %s11, 1
        // Predicated region
        $region13: #{_forward_batched.1} parent=11 // pred_check
          %p99 = pneg %p58
        $region14: #{_forward_batched.1} parent=11 // pred_check_branch
          %101 = sbr.rel (%p99) target = $region16
        $region15: #{_forward_batched.1} parent=11 // pred_region
          _
        $region16: #{_forward_batched.1} parent=11 // pred_fallthru
          _
      $region12: #{_forward_batched.1} parent=5 // pred_fallthru
        _
      %p102 = scmp.lt.s32.totalorder %s11, 2
      // Predicated region
      $region17: #{_forward_batched.1} parent=5 // pred_check
        %p103 = pneg %p102
      $region18: #{_forward_batched.1} parent=5 // pred_check_branch
        %105 = sbr.rel (%p103) target = $region20
      $region19: #{_forward_batched.1} parent=5 // pred_region
        // Predicated region
        $region21: #{_forward_batched.1} parent=19 // pred_check
          %p106 = pneg %p31
        $region22: #{_forward_batched.1} parent=19 // pred_check_branch
          %108 = sbr.rel (%p106) target = $region24
        $region23: #{_forward_batched.1} parent=19 // pred_region
          %p109 = scmp.lt.s32.totalorder %s11, 1
          %s110 = scalar_select %p109, %s11, 1
          %s111 = smul.addr %s110, 4
          %s112 = scalar_lea.vmem %s0, %s111
        $region24: #{_forward_batched.1} parent=19 // pred_fallthru
          _
      $region20: #{_forward_batched.1} parent=5 // pred_fallthru
        _
      %p113 = scmp.le.s32.totalorder 1, %s11
      %p114 = scmp.lt.s32.totalorder %s11, 3
      %p115 = pnand %p113, %p114
      %p116 = pneg %p115
      // Predicated region
      $region25: #{_forward_batched.1} parent=5 // pred_check
        _
      $region26: #{_forward_batched.1} parent=5 // pred_check_branch
        %118 = sbr.rel (%p115) target = $region28
      $region27: #{_forward_batched.1} parent=5 // pred_region
        %s119 = ssub.s32 %s11, 1
        %p120 = scmp.lt.s32.totalorder %s16, 1
        %s121 = scalar_select %p120, %s16, 1
        %s122 = smul.addr %s121, 4
        %s123 = scalar_lea.vmem %s0, %s122
        %p124 = pneg %p37
        %p125 = pneg %p34
        %p126 = pneg %p58
        %p127 = pneg %p55
        %p128 = pneg %p84
        %p129 = pneg %p81
        %s130 = sand.u32 %s71, 1
        %s131 = scalar_lea.sflag [#allocation3], %s130
        %s132 = sand.u32 %s71, 1
        %s133 = smul.addr %s132, 4
        %s134 = scalar_lea.vmem [#allocation2], %s133
        %p135 = scmp.lt.s32.totalorder %s16, 1
        %s136 = scalar_select %p135, %s16, 1
        %s137 = smul.addr %s136, 4
        %s138 = scalar_lea.vmem %s0, %s137
        %v139 = vld [vmem:[%s138] sm:$0xf]
        %v140 = vld [vmem:[%s1] sm:$0xff]
        %v141 = vld [vmem:[%s1 + $0x8] sm:$0xff]
        %143 = vset.pattern.permute.xlu0 0
        %144 = vperm.xlu0 %143, %v140
        %v145 = vpop.permute.xlu0 %144
        %148 = vset.pattern.permute.xlu0 0
        %149 = vperm.xlu0 %148, %v141
        %v150 = vpop.permute.xlu0 %149
        %v152 = vperm.slane %v139, 0
        %v153 = vmul.f32 %v145, %v152
        %v154 = vmul.f32 %v150, %v152
        %155 = vset.pattern.permute.xlu0 4
        %156 = vperm.xlu0 %155, %v140
        %v157 = vpop.permute.xlu0 %156
        %159 = vset.pattern.permute.xlu0 4
        %160 = vperm.xlu0 %159, %v141
        %v161 = vpop.permute.xlu0 %160
        %v163 = vperm.slane %v139, 1
        %v164 = vmul.f32 %v157, %v163
        %v165 = vmul.f32 %v161, %v163
        %v166 = vadd.f32 %v153, %v164
        %v167 = vadd.f32 %v154, %v165
        %v168 = vperm.slane %v139, 2
        %v169 = vmul.f32 %v145, %v168
        %v170 = vmul.f32 %v150, %v168
        %v171 = vperm.slane %v139, 3
        %v172 = vmul.f32 %v157, %v171
        %v173 = vmul.f32 %v161, %v171
        %v174 = vadd.f32 %v169, %v172
        %v175 = vadd.f32 %v170, %v173
        %v176 = vsub.f32 0.0, %v140
        %v177 = vsub.f32 0.0, %v141
        %178 = vrot.lane.b32.xlu0 %v140, 124
        %v179 = vpop.permute.xlu0 %178
        %180 = vrot.lane.b32.xlu0 %v141, 124
        %v181 = vpop.permute.xlu0 %180
        %v184 = vmul.f32 %v140, %v179
        %v185 = vmul.f32 %v141, %v181
        %188 = vrot.lane.b32.xlu0 %v184, 124
        %v189 = vpop.permute.xlu0 %188
        %190 = vrot.lane.b32.xlu0 %v185, 124
        %v191 = vpop.permute.xlu0 %190
        %v194 = vadd.f32 %v176, %v189
        %v195 = vadd.f32 %v177, %v191
        %196 = vset.pattern.permute.xlu0 1
        %197 = vperm.xlu0 %196, %v140
        %v198 = vpop.permute.xlu0 %197
        %200 = vset.pattern.permute.xlu0 1
        %201 = vperm.xlu0 %200, %v141
        %v202 = vpop.permute.xlu0 %201
        %v204 = vmul.f32 %v198, %v166
        %v205 = vmul.f32 %v202, %v167
        %206 = vset.pattern.permute.xlu0 5
        %207 = vperm.xlu0 %206, %v140
        %v208 = vpop.permute.xlu0 %207
        %210 = vset.pattern.permute.xlu0 5
        %211 = vperm.xlu0 %210, %v141
        %v212 = vpop.permute.xlu0 %211
        %v214 = vmul.f32 %v208, %v174
        %v215 = vmul.f32 %v212, %v175
        %v216 = vadd.f32 %v204, %v214
        %v217 = vadd.f32 %v205, %v215
        %220 = vrot.lane.b32.xlu0 %v194, 5
        %v221 = vpop.permute.xlu0 %220
        %222 = vrot.lane.b32.xlu0 %v195, 5
        %v223 = vpop.permute.xlu0 %222
        %v226 = vmul.f32 %v140, %v221
        %v227 = vmul.f32 %v141, %v223
        %230 = vrot.lane.b32.xlu0 %v226, 124
        %v231 = vpop.permute.xlu0 %230
        %232 = vrot.lane.b32.xlu0 %v227, 124
        %v233 = vpop.permute.xlu0 %232
        %v236 = vadd.f32 %v176, %v231
        %v237 = vadd.f32 %v177, %v233
        %238 = vset.pattern.permute.xlu0 2
        %239 = vperm.xlu0 %238, %v140
        %v240 = vpop.permute.xlu0 %239
        %242 = vset.pattern.permute.xlu0 2
        %243 = vperm.xlu0 %242, %v141
        %v244 = vpop.permute.xlu0 %243
        %v246 = vmul.f32 %v240, %v216
        %v247 = vmul.f32 %v244, %v217
        %250 = vrot.lane.b32.xlu0 %v236, 5
        %v251 = vpop.permute.xlu0 %250
        %252 = vrot.lane.b32.xlu0 %v237, 5
        %v253 = vpop.permute.xlu0 %252
        %v256 = vmul.f32 %v140, %v251
        %v257 = vmul.f32 %v141, %v253
        %259 = vset.pattern.permute.xlu0 6
        %260 = vperm.xlu0 %259, %v256
        %v261 = vpop.permute.xlu0 %260
        %264 = vset.pattern.permute.xlu0 6
        %265 = vperm.xlu0 %264, %v257
        %v266 = vpop.permute.xlu0 %265
        %v268 = vadd.f32 %v246, %v261
        %v269 = vadd.f32 %v247, %v266
        %v271 = vrot.slane %v269, 3
        %v273 = vsub.f32 %v268, %v271
        %v274 = vsub.f32 %v269, %v271
        %vm277 = vcmask 1044480
        %v278 = vrot.slane %v273, 3
        %v279 = vrot.slane %v274, 3
        %v280 = vsel %vm277, %v278, %v279
        %v282 = vmul.f32 %v268, %v280
        %v283 = vadd.f32 %v268, %v271
        %v284 = vadd.f32 %v269, %v271
        %v287 = vrot.slane %v283, 3
        %v288 = vrot.slane %v284, 3
        %v289 = vsel %vm277, %v287, %v288
        %v291 = vadd.f32 %v282, %v289
        %v292 = vmul.f32 %v291, 0.5
        %vm293 = vcmask 1043456
        %v294 = vsel %vm293, %v268, %v292
        %s295 = scalar_lea.vmem %s1, 16
        %v296 = vld [vmem:[%s295] sm:$0xff]
        %v297 = vld [vmem:[%s295 + $0x8] sm:$0xff]
        %299 = vset.pattern.permute.xlu0 0
        %300 = vperm.xlu0 %299, %v296
        %v301 = vpop.permute.xlu0 %300
        %304 = vset.pattern.permute.xlu0 0
        %305 = vperm.xlu0 %304, %v297
        %v306 = vpop.permute.xlu0 %305
        %v308 = vperm.slane %v294, 0
        %v309 = vmul.f32 %v301, %v308
        %v310 = vmul.f32 %v306, %v308
        %311 = vset.pattern.permute.xlu0 4
        %312 = vperm.xlu0 %311, %v296
        %v313 = vpop.permute.xlu0 %312
        %315 = vset.pattern.permute.xlu0 4
        %316 = vperm.xlu0 %315, %v297
        %v317 = vpop.permute.xlu0 %316
        %v319 = vperm.slane %v294, 1
        %v320 = vmul.f32 %v313, %v319
        %v321 = vmul.f32 %v317, %v319
        %v322 = vadd.f32 %v309, %v320
        %v323 = vadd.f32 %v310, %v321
        %v324 = vperm.slane %v294, 2
        %v325 = vmul.f32 %v301, %v324
        %v326 = vmul.f32 %v306, %v324
        %v327 = vperm.slane %v294, 3
        %v328 = vmul.f32 %v313, %v327
        %v329 = vmul.f32 %v317, %v327
        %v330 = vadd.f32 %v325, %v328
        %v331 = vadd.f32 %v326, %v329
        %v332 = vperm.slane %v294, 4
        %v333 = vmul.f32 %v301, %v332
        %v334 = vmul.f32 %v306, %v332
        %v335 = vperm.slane %v294, 5
        %v336 = vmul.f32 %v313, %v335
        %v337 = vmul.f32 %v317, %v335
        %v338 = vadd.f32 %v333, %v336
        %v339 = vadd.f32 %v334, %v337
        %v340 = vperm.slane %v294, 6
        %v341 = vmul.f32 %v301, %v340
        %v342 = vmul.f32 %v306, %v340
        %v343 = vsub.f32 0.0, %v296
        %v344 = vsub.f32 0.0, %v297
        %346 = vset.pattern.permute.xlu0 4
        %347 = vperm.xlu0 %346, %v343
        %v348 = vpop.permute.xlu0 %347
        %351 = vset.pattern.permute.xlu0 4
        %352 = vperm.xlu0 %351, %v344
        %v353 = vpop.permute.xlu0 %352
        %v355 = vadd.f32 %v341, %v348
        %v356 = vadd.f32 %v342, %v353
        %357 = vrot.lane.b32.xlu0 %v296, 124
        %v358 = vpop.permute.xlu0 %357
        %359 = vrot.lane.b32.xlu0 %v297, 124
        %v360 = vpop.permute.xlu0 %359
        %v363 = vmul.f32 %v296, %v358
        %v364 = vmul.f32 %v297, %v360
        %367 = vrot.lane.b32.xlu0 %v363, 124
        %v368 = vpop.permute.xlu0 %367
        %369 = vrot.lane.b32.xlu0 %v364, 124
        %v370 = vpop.permute.xlu0 %369
        %v373 = vadd.f32 %v343, %v368
        %v374 = vadd.f32 %v344, %v370
        %375 = vset.pattern.permute.xlu0 1
        %376 = vperm.xlu0 %375, %v296
        %v377 = vpop.permute.xlu0 %376
        %379 = vset.pattern.permute.xlu0 1
        %380 = vperm.xlu0 %379, %v297
        %v381 = vpop.permute.xlu0 %380
        %v383 = vmul.f32 %v377, %v322
        %v384 = vmul.f32 %v381, %v323
        %385 = vset.pattern.permute.xlu0 5
        %386 = vperm.xlu0 %385, %v296
        %v387 = vpop.permute.xlu0 %386
        %389 = vset.pattern.permute.xlu0 5
        %390 = vperm.xlu0 %389, %v297
        %v391 = vpop.permute.xlu0 %390
        %v393 = vmul.f32 %v387, %v330
        %v394 = vmul.f32 %v391, %v331
        %v395 = vadd.f32 %v383, %v393
        %v396 = vadd.f32 %v384, %v394
        %v397 = vmul.f32 %v377, %v338
        %v398 = vmul.f32 %v381, %v339
        %v399 = vmul.f32 %v387, %v355
        %v400 = vmul.f32 %v391, %v356
        %v401 = vadd.f32 %v397, %v399
        %v402 = vadd.f32 %v398, %v400
        %405 = vrot.lane.b32.xlu0 %v373, 5
        %v406 = vpop.permute.xlu0 %405
        %407 = vrot.lane.b32.xlu0 %v374, 5
        %v408 = vpop.permute.xlu0 %407
        %v411 = vmul.f32 %v296, %v406
        %v412 = vmul.f32 %v297, %v408
        %415 = vrot.lane.b32.xlu0 %v411, 124
        %v416 = vpop.permute.xlu0 %415
        %417 = vrot.lane.b32.xlu0 %v412, 124
        %v418 = vpop.permute.xlu0 %417
        %v421 = vadd.f32 %v343, %v416
        %v422 = vadd.f32 %v344, %v418
        %423 = vset.pattern.permute.xlu0 2
        %424 = vperm.xlu0 %423, %v296
        %v425 = vpop.permute.xlu0 %424
        %427 = vset.pattern.permute.xlu0 2
        %428 = vperm.xlu0 %427, %v297
        %v429 = vpop.permute.xlu0 %428
        %v431 = vmul.f32 %v425, %v395
        %v432 = vmul.f32 %v429, %v396
        %433 = vset.pattern.permute.xlu0 6
        %434 = vperm.xlu0 %433, %v296
        %v435 = vpop.permute.xlu0 %434
        %437 = vset.pattern.permute.xlu0 6
        %438 = vperm.xlu0 %437, %v297
        %v439 = vpop.permute.xlu0 %438
        %v441 = vmul.f32 %v435, %v401
        %v442 = vmul.f32 %v439, %v402
        %v443 = vadd.f32 %v431, %v441
        %v444 = vadd.f32 %v432, %v442
        %447 = vrot.lane.b32.xlu0 %v421, 5
        %v448 = vpop.permute.xlu0 %447
        %449 = vrot.lane.b32.xlu0 %v422, 5
        %v450 = vpop.permute.xlu0 %449
        %v453 = vmul.f32 %v296, %v448
        %v454 = vmul.f32 %v297, %v450
        %457 = vrot.lane.b32.xlu0 %v453, 124
        %v458 = vpop.permute.xlu0 %457
        %459 = vrot.lane.b32.xlu0 %v454, 124
        %v460 = vpop.permute.xlu0 %459
        %v463 = vadd.f32 %v343, %v458
        %v464 = vadd.f32 %v344, %v460
        %465 = vset.pattern.permute.xlu0 3
        %466 = vperm.xlu0 %465, %v296
        %v467 = vpop.permute.xlu0 %466
        %469 = vset.pattern.permute.xlu0 3
        %470 = vperm.xlu0 %469, %v297
        %v471 = vpop.permute.xlu0 %470
        %v473 = vmul.f32 %v467, %v443
        %v474 = vmul.f32 %v471, %v444
        %477 = vrot.lane.b32.xlu0 %v463, 5
        %v478 = vpop.permute.xlu0 %477
        %479 = vrot.lane.b32.xlu0 %v464, 5
        %v480 = vpop.permute.xlu0 %479
        %v483 = vmul.f32 %v296, %v478
        %v484 = vmul.f32 %v297, %v480
        %486 = vset.pattern.permute.xlu0 7
        %487 = vperm.xlu0 %486, %v483
        %v488 = vpop.permute.xlu0 %487
        %491 = vset.pattern.permute.xlu0 7
        %492 = vperm.xlu0 %491, %v484
        %v493 = vpop.permute.xlu0 %492
        %v495 = vadd.f32 %v473, %v488
        %v496 = vadd.f32 %v474, %v493
        %v498 = vrot.slane %v496, 3
        %v500 = vsub.f32 %v496, %v498
        %v502 = vrot.slane %v500, 3
        %v504 = vmul.f32 %v495, %v502
        %v505 = vmul.f32 %v496, %v502
        %v506 = vadd.f32 %v496, %v498
        %v508 = vrot.slane %v506, 3
        %v510 = vadd.f32 %v504, %v508
        %v511 = vadd.f32 %v505, %v508
        %v512 = vmul.f32 %v510, 0.5
        %v513 = vmul.f32 %v511, 0.5
        %vm514 = vcmask 1045504
        %v515 = vsel %vm514, %v495, %v512
        %s516 = scalar_lea.vmem %s1, 32
        %v517 = vld [vmem:[%s516] sm:$0xff]
        %v518 = vld [vmem:[%s516 + $0x8] sm:$0xff]
        %520 = vset.pattern.permute.xlu0 0
        %521 = vperm.xlu0 %520, %v517
        %v522 = vpop.permute.xlu0 %521
        %525 = vset.pattern.permute.xlu0 0
        %526 = vperm.xlu0 %525, %v518
        %v527 = vpop.permute.xlu0 %526
        %v529 = vperm.slane %v515, 0
        %v530 = vmul.f32 %v522, %v529
        %v531 = vmul.f32 %v527, %v529
        %532 = vset.pattern.permute.xlu0 4
        %533 = vperm.xlu0 %532, %v517
        %v534 = vpop.permute.xlu0 %533
        %536 = vset.pattern.permute.xlu0 4
        %537 = vperm.xlu0 %536, %v518
        %v538 = vpop.permute.xlu0 %537
        %v540 = vperm.slane %v515, 1
        %v541 = vmul.f32 %v534, %v540
        %v542 = vmul.f32 %v538, %v540
        %v543 = vadd.f32 %v530, %v541
        %v544 = vadd.f32 %v531, %v542
        %v545 = vperm.slane %v515, 2
        %v546 = vmul.f32 %v522, %v545
        %v547 = vmul.f32 %v527, %v545
        %v548 = vperm.slane %v515, 3
        %v549 = vmul.f32 %v534, %v548
        %v550 = vmul.f32 %v538, %v548
        %v551 = vadd.f32 %v546, %v549
        %v552 = vadd.f32 %v547, %v550
        %v553 = vperm.slane %v515, 4
        %v554 = vmul.f32 %v522, %v553
        %v555 = vmul.f32 %v527, %v553
        %v556 = vperm.slane %v515, 5
        %v557 = vmul.f32 %v534, %v556
        %v558 = vmul.f32 %v538, %v556
        %v559 = vadd.f32 %v554, %v557
        %v560 = vadd.f32 %v555, %v558
        %v561 = vperm.slane %v515, 6
        %v562 = vmul.f32 %v522, %v561
        %v563 = vmul.f32 %v527, %v561
        %v564 = vperm.slane %v515, 7
        %v565 = vmul.f32 %v534, %v564
        %v566 = vmul.f32 %v538, %v564
        %v567 = vadd.f32 %v562, %v565
        %v568 = vadd.f32 %v563, %v566
        %v569 = vperm.slane %v513, 0
        %v570 = vmul.f32 %v522, %v569
        %v571 = vmul.f32 %v527, %v569
        %v572 = vsub.f32 0.0, %v517
        %v573 = vsub.f32 0.0, %v518
        %575 = vset.pattern.permute.xlu0 4
        %576 = vperm.xlu0 %575, %v572
        %v577 = vpop.permute.xlu0 %576
        %580 = vset.pattern.permute.xlu0 4
        %581 = vperm.xlu0 %580, %v573
        %v582 = vpop.permute.xlu0 %581
        %v584 = vadd.f32 %v570, %v577
        %v585 = vadd.f32 %v571, %v582
        %586 = vrot.lane.b32.xlu0 %v517, 124
        %v587 = vpop.permute.xlu0 %586
        %588 = vrot.lane.b32.xlu0 %v518, 124
        %v589 = vpop.permute.xlu0 %588
        %v592 = vmul.f32 %v517, %v587
        %v593 = vmul.f32 %v518, %v589
        %596 = vrot.lane.b32.xlu0 %v592, 124
        %v597 = vpop.permute.xlu0 %596
        %598 = vrot.lane.b32.xlu0 %v593, 124
        %v599 = vpop.permute.xlu0 %598
        %v602 = vadd.f32 %v572, %v597
        %v603 = vadd.f32 %v573, %v599
        %604 = vset.pattern.permute.xlu0 1
        %605 = vperm.xlu0 %604, %v517
        %v606 = vpop.permute.xlu0 %605
        %608 = vset.pattern.permute.xlu0 1
        %609 = vperm.xlu0 %608, %v518
        %v610 = vpop.permute.xlu0 %609
        %v612 = vmul.f32 %v606, %v543
        %v613 = vmul.f32 %v610, %v544
        %614 = vset.pattern.permute.xlu0 5
        %615 = vperm.xlu0 %614, %v517
        %v616 = vpop.permute.xlu0 %615
        %618 = vset.pattern.permute.xlu0 5
        %619 = vperm.xlu0 %618, %v518
        %v620 = vpop.permute.xlu0 %619
        %v622 = vmul.f32 %v616, %v551
        %v623 = vmul.f32 %v620, %v552
        %v624 = vadd.f32 %v612, %v622
        %v625 = vadd.f32 %v613, %v623
        %v626 = vmul.f32 %v606, %v559
        %v627 = vmul.f32 %v610, %v560
        %v628 = vmul.f32 %v616, %v567
        %v629 = vmul.f32 %v620, %v568
        %v630 = vadd.f32 %v626, %v628
        %v631 = vadd.f32 %v627, %v629
        %v632 = vmul.f32 %v606, %v584
        %v633 = vmul.f32 %v610, %v585
        %634 = vset.pattern.permute.xlu0 5
        %635 = vperm.xlu0 %634, %v572
        %v636 = vpop.permute.xlu0 %635
        %638 = vset.pattern.permute.xlu0 5
        %639 = vperm.xlu0 %638, %v573
        %v640 = vpop.permute.xlu0 %639
        %v642 = vadd.f32 %v632, %v636
        %v643 = vadd.f32 %v633, %v640
        %646 = vrot.lane.b32.xlu0 %v602, 5
        %v647 = vpop.permute.xlu0 %646
        %648 = vrot.lane.b32.xlu0 %v603, 5
        %v649 = vpop.permute.xlu0 %648
        %v652 = vmul.f32 %v517, %v647
        %v653 = vmul.f32 %v518, %v649
        %656 = vrot.lane.b32.xlu0 %v652, 124
        %v657 = vpop.permute.xlu0 %656
        %658 = vrot.lane.b32.xlu0 %v653, 124
        %v659 = vpop.permute.xlu0 %658
        %v662 = vadd.f32 %v572, %v657
        %v663 = vadd.f32 %v573, %v659
        %664 = vset.pattern.permute.xlu0 2
        %665 = vperm.xlu0 %664, %v517
        %v666 = vpop.permute.xlu0 %665
        %668 = vset.pattern.permute.xlu0 2
        %669 = vperm.xlu0 %668, %v518
        %v670 = vpop.permute.xlu0 %669
        %v672 = vmul.f32 %v666, %v624
        %v673 = vmul.f32 %v670, %v625
        %674 = vset.pattern.permute.xlu0 6
        %675 = vperm.xlu0 %674, %v517
        %v676 = vpop.permute.xlu0 %675
        %678 = vset.pattern.permute.xlu0 6
        %679 = vperm.xlu0 %678, %v518
        %v680 = vpop.permute.xlu0 %679
        %v682 = vmul.f32 %v676, %v630
        %v683 = vmul.f32 %v680, %v631
        %v684 = vadd.f32 %v672, %v682
        %v685 = vadd.f32 %v673, %v683
        %v686 = vmul.f32 %v666, %v642
        %v687 = vmul.f32 %v670, %v643
        %690 = vrot.lane.b32.xlu0 %v662, 5
        %v691 = vpop.permute.xlu0 %690
        %692 = vrot.lane.b32.xlu0 %v663, 5
        %v693 = vpop.permute.xlu0 %692
        %v696 = vmul.f32 %v517, %v691
        %v697 = vmul.f32 %v518, %v693
        %699 = vset.pattern.permute.xlu0 6
        %700 = vperm.xlu0 %699, %v696
        %v701 = vpop.permute.xlu0 %700
        %704 = vset.pattern.permute.xlu0 6
        %705 = vperm.xlu0 %704, %v697
        %v706 = vpop.permute.xlu0 %705
        %v708 = vadd.f32 %v686, %v701
        %v709 = vadd.f32 %v687, %v706
        %710 = vset.pattern.permute.xlu0 3
        %711 = vperm.xlu0 %710, %v517
        %v712 = vpop.permute.xlu0 %711
        %714 = vset.pattern.permute.xlu0 3
        %715 = vperm.xlu0 %714, %v518
        %v716 = vpop.permute.xlu0 %715
        %v718 = vmul.f32 %v712, %v684
        %v719 = vmul.f32 %v716, %v685
        %720 = vset.pattern.permute.xlu0 7
        %721 = vperm.xlu0 %720, %v517
        %v722 = vpop.permute.xlu0 %721
        %724 = vset.pattern.permute.xlu0 7
        %725 = vperm.xlu0 %724, %v518
        %v726 = vpop.permute.xlu0 %725
        %v728 = vmul.f32 %v722, %v708
        %v729 = vmul.f32 %v726, %v709
        %v730 = vadd.f32 %v718, %v728
        %v731 = vadd.f32 %v719, %v729
        %v733 = vrot.slane %v731, 3
        %v735 = vsub.f32 %v731, %v733
        %v737 = vrot.slane %v735, 3
        %v739 = vmul.f32 %v730, %v737
        %v740 = vmul.f32 %v731, %v737
        %v741 = vadd.f32 %v731, %v733
        %v743 = vrot.slane %v741, 3
        %v745 = vadd.f32 %v739, %v743
        %v746 = vadd.f32 %v740, %v743
        %v747 = vmul.f32 %v745, 0.5
        %v748 = vmul.f32 %v746, 0.5
        %v749 = vsel %vm514, %v730, %v747
        %s750 = scalar_lea.vmem %s1, 48
        %v751 = vld [vmem:[%s750] sm:$0xff]
        %v752 = vld [vmem:[%s750 + $0x8] sm:$0xff]
        %754 = vset.pattern.permute.xlu0 0
        %755 = vperm.xlu0 %754, %v751
        %v756 = vpop.permute.xlu0 %755
        %759 = vset.pattern.permute.xlu0 0
        %760 = vperm.xlu0 %759, %v752
        %v761 = vpop.permute.xlu0 %760
        %v763 = vperm.slane %v749, 0
        %v764 = vmul.f32 %v756, %v763
        %v765 = vmul.f32 %v761, %v763
        %766 = vset.pattern.permute.xlu0 4
        %767 = vperm.xlu0 %766, %v751
        %v768 = vpop.permute.xlu0 %767
        %770 = vset.pattern.permute.xlu0 4
        %771 = vperm.xlu0 %770, %v752
        %v772 = vpop.permute.xlu0 %771
        %v774 = vperm.slane %v749, 1
        %v775 = vmul.f32 %v768, %v774
        %v776 = vmul.f32 %v772, %v774
        %v777 = vadd.f32 %v764, %v775
        %v778 = vadd.f32 %v765, %v776
        %v779 = vperm.slane %v749, 2
        %v780 = vmul.f32 %v756, %v779
        %v781 = vmul.f32 %v761, %v779
        %v782 = vperm.slane %v749, 3
        %v783 = vmul.f32 %v768, %v782
        %v784 = vmul.f32 %v772, %v782
        %v785 = vadd.f32 %v780, %v783
        %v786 = vadd.f32 %v781, %v784
        %v787 = vperm.slane %v749, 4
        %v788 = vmul.f32 %v756, %v787
        %v789 = vmul.f32 %v761, %v787
        %v790 = vperm.slane %v749, 5
        %v791 = vmul.f32 %v768, %v790
        %v792 = vmul.f32 %v772, %v790
        %v793 = vadd.f32 %v788, %v791
        %v794 = vadd.f32 %v789, %v792
        %v795 = vperm.slane %v749, 6
        %v796 = vmul.f32 %v756, %v795
        %v797 = vmul.f32 %v761, %v795
        %v798 = vperm.slane %v749, 7
        %v799 = vmul.f32 %v768, %v798
        %v800 = vmul.f32 %v772, %v798
        %v801 = vadd.f32 %v796, %v799
        %v802 = vadd.f32 %v797, %v800
        %v803 = vperm.slane %v748, 0
        %v804 = vmul.f32 %v756, %v803
        %v805 = vmul.f32 %v761, %v803
        %v806 = vsub.f32 0.0, %v751
        %v807 = vsub.f32 0.0, %v752
        %809 = vset.pattern.permute.xlu0 4
        %810 = vperm.xlu0 %809, %v806
        %v811 = vpop.permute.xlu0 %810
        %814 = vset.pattern.permute.xlu0 4
        %815 = vperm.xlu0 %814, %v807
        %v816 = vpop.permute.xlu0 %815
        %v818 = vadd.f32 %v804, %v811
        %v819 = vadd.f32 %v805, %v816
        %820 = vrot.lane.b32.xlu0 %v751, 124
        %v821 = vpop.permute.xlu0 %820
        %822 = vrot.lane.b32.xlu0 %v752, 124
        %v823 = vpop.permute.xlu0 %822
        %v826 = vmul.f32 %v751, %v821
        %v827 = vmul.f32 %v752, %v823
        %830 = vrot.lane.b32.xlu0 %v826, 124
        %v831 = vpop.permute.xlu0 %830
        %832 = vrot.lane.b32.xlu0 %v827, 124
        %v833 = vpop.permute.xlu0 %832
        %v836 = vadd.f32 %v806, %v831
        %v837 = vadd.f32 %v807, %v833
        %838 = vset.pattern.permute.xlu0 1
        %839 = vperm.xlu0 %838, %v751
        %v840 = vpop.permute.xlu0 %839
        %842 = vset.pattern.permute.xlu0 1
        %843 = vperm.xlu0 %842, %v752
        %v844 = vpop.permute.xlu0 %843
        %v846 = vmul.f32 %v840, %v777
        %v847 = vmul.f32 %v844, %v778
        %848 = vset.pattern.permute.xlu0 5
        %849 = vperm.xlu0 %848, %v751
        %v850 = vpop.permute.xlu0 %849
        %852 = vset.pattern.permute.xlu0 5
        %853 = vperm.xlu0 %852, %v752
        %v854 = vpop.permute.xlu0 %853
        %v856 = vmul.f32 %v850, %v785
        %v857 = vmul.f32 %v854, %v786
        %v858 = vadd.f32 %v846, %v856
        %v859 = vadd.f32 %v847, %v857
        %v860 = vmul.f32 %v840, %v793
        %v861 = vmul.f32 %v844, %v794
        %v862 = vmul.f32 %v850, %v801
        %v863 = vmul.f32 %v854, %v802
        %v864 = vadd.f32 %v860, %v862
        %v865 = vadd.f32 %v861, %v863
        %v866 = vmul.f32 %v840, %v818
        %v867 = vmul.f32 %v844, %v819
        %868 = vset.pattern.permute.xlu0 5
        %869 = vperm.xlu0 %868, %v806
        %v870 = vpop.permute.xlu0 %869
        %872 = vset.pattern.permute.xlu0 5
        %873 = vperm.xlu0 %872, %v807
        %v874 = vpop.permute.xlu0 %873
        %v876 = vadd.f32 %v866, %v870
        %v877 = vadd.f32 %v867, %v874
        %880 = vrot.lane.b32.xlu0 %v836, 5
        %v881 = vpop.permute.xlu0 %880
        %882 = vrot.lane.b32.xlu0 %v837, 5
        %v883 = vpop.permute.xlu0 %882
        %v886 = vmul.f32 %v751, %v881
        %v887 = vmul.f32 %v752, %v883
        %890 = vrot.lane.b32.xlu0 %v886, 124
        %v891 = vpop.permute.xlu0 %890
        %892 = vrot.lane.b32.xlu0 %v887, 124
        %v893 = vpop.permute.xlu0 %892
        %v896 = vadd.f32 %v806, %v891
        %v897 = vadd.f32 %v807, %v893
        %898 = vset.pattern.permute.xlu0 2
        %899 = vperm.xlu0 %898, %v751
        %v900 = vpop.permute.xlu0 %899
        %902 = vset.pattern.permute.xlu0 2
        %903 = vperm.xlu0 %902, %v752
        %v904 = vpop.permute.xlu0 %903
        %v906 = vmul.f32 %v900, %v858
        %v907 = vmul.f32 %v904, %v859
        %908 = vset.pattern.permute.xlu0 6
        %909 = vperm.xlu0 %908, %v751
        %v910 = vpop.permute.xlu0 %909
        %912 = vset.pattern.permute.xlu0 6
        %913 = vperm.xlu0 %912, %v752
        %v914 = vpop.permute.xlu0 %913
        %v916 = vmul.f32 %v910, %v864
        %v917 = vmul.f32 %v914, %v865
        %v918 = vadd.f32 %v906, %v916
        %v919 = vadd.f32 %v907, %v917
        %v920 = vmul.f32 %v900, %v876
        %v921 = vmul.f32 %v904, %v877
        %924 = vrot.lane.b32.xlu0 %v896, 5
        %v925 = vpop.permute.xlu0 %924
        %926 = vrot.lane.b32.xlu0 %v897, 5
        %v927 = vpop.permute.xlu0 %926
        %v930 = vmul.f32 %v751, %v925
        %v931 = vmul.f32 %v752, %v927
        %933 = vset.pattern.permute.xlu0 6
        %934 = vperm.xlu0 %933, %v930
        %v935 = vpop.permute.xlu0 %934
        %938 = vset.pattern.permute.xlu0 6
        %939 = vperm.xlu0 %938, %v931
        %v940 = vpop.permute.xlu0 %939
        %v942 = vadd.f32 %v920, %v935
        %v943 = vadd.f32 %v921, %v940
        %944 = vset.pattern.permute.xlu0 3
        %945 = vperm.xlu0 %944, %v751
        %v946 = vpop.permute.xlu0 %945
        %948 = vset.pattern.permute.xlu0 3
        %949 = vperm.xlu0 %948, %v752
        %v950 = vpop.permute.xlu0 %949
        %v952 = vmul.f32 %v946, %v918
        %v953 = vmul.f32 %v950, %v919
        %954 = vset.pattern.permute.xlu0 7
        %955 = vperm.xlu0 %954, %v751
        %v956 = vpop.permute.xlu0 %955
        %958 = vset.pattern.permute.xlu0 7
        %959 = vperm.xlu0 %958, %v752
        %v960 = vpop.permute.xlu0 %959
        %v962 = vmul.f32 %v956, %v942
        %v963 = vmul.f32 %v960, %v943
        %v964 = vadd.f32 %v952, %v962
        %v965 = vadd.f32 %v953, %v963
        %v967 = vrot.slane %v965, 3
        %v969 = vsub.f32 %v965, %v967
        %v971 = vrot.slane %v969, 3
        %v973 = vmul.f32 %v964, %v971
        %v974 = vmul.f32 %v965, %v971
        %v975 = vadd.f32 %v965, %v967
        %v977 = vrot.slane %v975, 3
        %v979 = vadd.f32 %v973, %v977
        %v980 = vadd.f32 %v974, %v977
        %v981 = vmul.f32 %v979, 0.5
        %v982 = vmul.f32 %v980, 0.5
        %v983 = vsel %vm514, %v964, %v981
        %s984 = scalar_lea.vmem %s1, 64
        %v985 = vld [vmem:[%s984] sm:$0xff]
        %v986 = vld [vmem:[%s984 + $0x8] sm:$0xff]
        %988 = vset.pattern.permute.xlu0 0
        %989 = vperm.xlu0 %988, %v985
        %v990 = vpop.permute.xlu0 %989
        %993 = vset.pattern.permute.xlu0 0
        %994 = vperm.xlu0 %993, %v986
        %v995 = vpop.permute.xlu0 %994
        %v997 = vperm.slane %v983, 0
        %v998 = vmul.f32 %v990, %v997
        %v999 = vmul.f32 %v995, %v997
        %1000 = vset.pattern.permute.xlu0 4
        %1001 = vperm.xlu0 %1000, %v985
        %v1002 = vpop.permute.xlu0 %1001
        %1004 = vset.pattern.permute.xlu0 4
        %1005 = vperm.xlu0 %1004, %v986
        %v1006 = vpop.permute.xlu0 %1005
        %v1008 = vperm.slane %v983, 1
        %v1009 = vmul.f32 %v1002, %v1008
        %v1010 = vmul.f32 %v1006, %v1008
        %v1011 = vadd.f32 %v998, %v1009
        %v1012 = vadd.f32 %v999, %v1010
        %v1013 = vperm.slane %v983, 2
        %v1014 = vmul.f32 %v990, %v1013
        %v1015 = vmul.f32 %v995, %v1013
        %v1016 = vperm.slane %v983, 3
        %v1017 = vmul.f32 %v1002, %v1016
        %v1018 = vmul.f32 %v1006, %v1016
        %v1019 = vadd.f32 %v1014, %v1017
        %v1020 = vadd.f32 %v1015, %v1018
        %v1021 = vperm.slane %v983, 4
        %v1022 = vmul.f32 %v990, %v1021
        %v1023 = vmul.f32 %v995, %v1021
        %v1024 = vperm.slane %v983, 5
        %v1025 = vmul.f32 %v1002, %v1024
        %v1026 = vmul.f32 %v1006, %v1024
        %v1027 = vadd.f32 %v1022, %v1025
        %v1028 = vadd.f32 %v1023, %v1026
        %v1029 = vperm.slane %v983, 6
        %v1030 = vmul.f32 %v990, %v1029
        %v1031 = vmul.f32 %v995, %v1029
        %v1032 = vperm.slane %v983, 7
        %v1033 = vmul.f32 %v1002, %v1032
        %v1034 = vmul.f32 %v1006, %v1032
        %v1035 = vadd.f32 %v1030, %v1033
        %v1036 = vadd.f32 %v1031, %v1034
        %v1037 = vperm.slane %v982, 0
        %v1038 = vmul.f32 %v990, %v1037
        %v1039 = vmul.f32 %v995, %v1037
        %v1040 = vsub.f32 0.0, %v985
        %v1041 = vsub.f32 0.0, %v986
        %1043 = vset.pattern.permute.xlu0 4
        %1044 = vperm.xlu0 %1043, %v1040
        %v1045 = vpop.permute.xlu0 %1044
        %1048 = vset.pattern.permute.xlu0 4
        %1049 = vperm.xlu0 %1048, %v1041
        %v1050 = vpop.permute.xlu0 %1049
        %v1052 = vadd.f32 %v1038, %v1045
        %v1053 = vadd.f32 %v1039, %v1050
        %1054 = vrot.lane.b32.xlu0 %v985, 124
        %v1055 = vpop.permute.xlu0 %1054
        %1056 = vrot.lane.b32.xlu0 %v986, 124
        %v1057 = vpop.permute.xlu0 %1056
        %v1060 = vmul.f32 %v985, %v1055
        %v1061 = vmul.f32 %v986, %v1057
        %1064 = vrot.lane.b32.xlu0 %v1060, 124
        %v1065 = vpop.permute.xlu0 %1064
        %1066 = vrot.lane.b32.xlu0 %v1061, 124
        %v1067 = vpop.permute.xlu0 %1066
        %v1070 = vadd.f32 %v1040, %v1065
        %v1071 = vadd.f32 %v1041, %v1067
        %1072 = vset.pattern.permute.xlu0 1
        %1073 = vperm.xlu0 %1072, %v985
        %v1074 = vpop.permute.xlu0 %1073
        %1076 = vset.pattern.permute.xlu0 1
        %1077 = vperm.xlu0 %1076, %v986
        %v1078 = vpop.permute.xlu0 %1077
        %v1080 = vmul.f32 %v1074, %v1011
        %v1081 = vmul.f32 %v1078, %v1012
        %1082 = vset.pattern.permute.xlu0 5
        %1083 = vperm.xlu0 %1082, %v985
        %v1084 = vpop.permute.xlu0 %1083
        %1086 = vset.pattern.permute.xlu0 5
        %1087 = vperm.xlu0 %1086, %v986
        %v1088 = vpop.permute.xlu0 %1087
        %v1090 = vmul.f32 %v1084, %v1019
        %v1091 = vmul.f32 %v1088, %v1020
        %v1092 = vadd.f32 %v1080, %v1090
        %v1093 = vadd.f32 %v1081, %v1091
        %v1094 = vmul.f32 %v1074, %v1027
        %v1095 = vmul.f32 %v1078, %v1028
        %v1096 = vmul.f32 %v1084, %v1035
        %v1097 = vmul.f32 %v1088, %v1036
        %v1098 = vadd.f32 %v1094, %v1096
        %v1099 = vadd.f32 %v1095, %v1097
        %v1100 = vmul.f32 %v1074, %v1052
        %v1101 = vmul.f32 %v1078, %v1053
        %1102 = vset.pattern.permute.xlu0 5
        %1103 = vperm.xlu0 %1102, %v1040
        %v1104 = vpop.permute.xlu0 %1103
        %1106 = vset.pattern.permute.xlu0 5
        %1107 = vperm.xlu0 %1106, %v1041
        %v1108 = vpop.permute.xlu0 %1107
        %v1110 = vadd.f32 %v1100, %v1104
        %v1111 = vadd.f32 %v1101, %v1108
        %1114 = vrot.lane.b32.xlu0 %v1070, 5
        %v1115 = vpop.permute.xlu0 %1114
        %1116 = vrot.lane.b32.xlu0 %v1071, 5
        %v1117 = vpop.permute.xlu0 %1116
        %v1120 = vmul.f32 %v985, %v1115
        %v1121 = vmul.f32 %v986, %v1117
        %1124 = vrot.lane.b32.xlu0 %v1120, 124
        %v1125 = vpop.permute.xlu0 %1124
        %1126 = vrot.lane.b32.xlu0 %v1121, 124
        %v1127 = vpop.permute.xlu0 %1126
        %v1130 = vadd.f32 %v1040, %v1125
        %v1131 = vadd.f32 %v1041, %v1127
        %1132 = vset.pattern.permute.xlu0 2
        %1133 = vperm.xlu0 %1132, %v985
        %v1134 = vpop.permute.xlu0 %1133
        %1136 = vset.pattern.permute.xlu0 2
        %1137 = vperm.xlu0 %1136, %v986
        %v1138 = vpop.permute.xlu0 %1137
        %v1140 = vmul.f32 %v1134, %v1092
        %v1141 = vmul.f32 %v1138, %v1093
        %1142 = vset.pattern.permute.xlu0 6
        %1143 = vperm.xlu0 %1142, %v985
        %v1144 = vpop.permute.xlu0 %1143
        %1146 = vset.pattern.permute.xlu0 6
        %1147 = vperm.xlu0 %1146, %v986
        %v1148 = vpop.permute.xlu0 %1147
        %v1150 = vmul.f32 %v1144, %v1098
        %v1151 = vmul.f32 %v1148, %v1099
        %v1152 = vadd.f32 %v1140, %v1150
        %v1153 = vadd.f32 %v1141, %v1151
        %v1154 = vmul.f32 %v1134, %v1110
        %v1155 = vmul.f32 %v1138, %v1111
        %1158 = vrot.lane.b32.xlu0 %v1130, 5
        %v1159 = vpop.permute.xlu0 %1158
        %1160 = vrot.lane.b32.xlu0 %v1131, 5
        %v1161 = vpop.permute.xlu0 %1160
        %v1164 = vmul.f32 %v985, %v1159
        %v1165 = vmul.f32 %v986, %v1161
        %1167 = vset.pattern.permute.xlu0 6
        %1168 = vperm.xlu0 %1167, %v1164
        %v1169 = vpop.permute.xlu0 %1168
        %1172 = vset.pattern.permute.xlu0 6
        %1173 = vperm.xlu0 %1172, %v1165
        %v1174 = vpop.permute.xlu0 %1173
        %v1176 = vadd.f32 %v1154, %v1169
        %v1177 = vadd.f32 %v1155, %v1174
        %1178 = vset.pattern.permute.xlu0 3
        %1179 = vperm.xlu0 %1178, %v985
        %v1180 = vpop.permute.xlu0 %1179
        %1182 = vset.pattern.permute.xlu0 3
        %1183 = vperm.xlu0 %1182, %v986
        %v1184 = vpop.permute.xlu0 %1183
        %v1186 = vmul.f32 %v1180, %v1152
        %v1187 = vmul.f32 %v1184, %v1153
        %1188 = vset.pattern.permute.xlu0 7
        %1189 = vperm.xlu0 %1188, %v985
        %v1190 = vpop.permute.xlu0 %1189
        %1192 = vset.pattern.permute.xlu0 7
        %1193 = vperm.xlu0 %1192, %v986
        %v1194 = vpop.permute.xlu0 %1193
        %v1196 = vmul.f32 %v1190, %v1176
        %v1197 = vmul.f32 %v1194, %v1177
        %v1198 = vadd.f32 %v1186, %v1196
        %v1199 = vadd.f32 %v1187, %v1197
        %v1201 = vrot.slane %v1199, 3
        %v1203 = vsub.f32 %v1199, %v1201
        %v1205 = vrot.slane %v1203, 3
        %v1207 = vmul.f32 %v1198, %v1205
        %v1208 = vmul.f32 %v1199, %v1205
        %v1209 = vadd.f32 %v1199, %v1201
        %v1211 = vrot.slane %v1209, 3
        %v1213 = vadd.f32 %v1207, %v1211
        %v1214 = vadd.f32 %v1208, %v1211
        %v1215 = vmul.f32 %v1213, 0.5
        %v1216 = vmul.f32 %v1214, 0.5
        %v1217 = vsel %vm514, %v1198, %v1215
        %s1218 = scalar_lea.vmem %s1, 80
        %v1219 = vld [vmem:[%s1218] sm:$0xff]
        %v1220 = vld [vmem:[%s1218 + $0x8] sm:$0xff]
        %1222 = vset.pattern.permute.xlu0 0
        %1223 = vperm.xlu0 %1222, %v1219
        %v1224 = vpop.permute.xlu0 %1223
        %1227 = vset.pattern.permute.xlu0 0
        %1228 = vperm.xlu0 %1227, %v1220
        %v1229 = vpop.permute.xlu0 %1228
        %v1231 = vperm.slane %v1217, 0
        %v1232 = vmul.f32 %v1224, %v1231
        %v1233 = vmul.f32 %v1229, %v1231
        %1234 = vset.pattern.permute.xlu0 4
        %1235 = vperm.xlu0 %1234, %v1219
        %v1236 = vpop.permute.xlu0 %1235
        %1238 = vset.pattern.permute.xlu0 4
        %1239 = vperm.xlu0 %1238, %v1220
        %v1240 = vpop.permute.xlu0 %1239
        %v1242 = vperm.slane %v1217, 1
        %v1243 = vmul.f32 %v1236, %v1242
        %v1244 = vmul.f32 %v1240, %v1242
        %v1245 = vadd.f32 %v1232, %v1243
        %v1246 = vadd.f32 %v1233, %v1244
        %v1247 = vperm.slane %v1217, 2
        %v1248 = vmul.f32 %v1224, %v1247
        %v1249 = vmul.f32 %v1229, %v1247
        %v1250 = vperm.slane %v1217, 3
        %v1251 = vmul.f32 %v1236, %v1250
        %v1252 = vmul.f32 %v1240, %v1250
        %v1253 = vadd.f32 %v1248, %v1251
        %v1254 = vadd.f32 %v1249, %v1252
        %v1255 = vperm.slane %v1217, 4
        %v1256 = vmul.f32 %v1224, %v1255
        %v1257 = vmul.f32 %v1229, %v1255
        %v1258 = vperm.slane %v1217, 5
        %v1259 = vmul.f32 %v1236, %v1258
        %v1260 = vmul.f32 %v1240, %v1258
        %v1261 = vadd.f32 %v1256, %v1259
        %v1262 = vadd.f32 %v1257, %v1260
        %v1263 = vperm.slane %v1217, 6
        %v1264 = vmul.f32 %v1224, %v1263
        %v1265 = vmul.f32 %v1229, %v1263
        %v1266 = vperm.slane %v1217, 7
        %v1267 = vmul.f32 %v1236, %v1266
        %v1268 = vmul.f32 %v1240, %v1266
        %v1269 = vadd.f32 %v1264, %v1267
        %v1270 = vadd.f32 %v1265, %v1268
        %v1271 = vperm.slane %v1216, 0
        %v1272 = vmul.f32 %v1224, %v1271
        %v1273 = vmul.f32 %v1229, %v1271
        %v1274 = vsub.f32 0.0, %v1219
        %v1275 = vsub.f32 0.0, %v1220
        %1277 = vset.pattern.permute.xlu0 4
        %1278 = vperm.xlu0 %1277, %v1274
        %v1279 = vpop.permute.xlu0 %1278
        %1282 = vset.pattern.permute.xlu0 4
        %1283 = vperm.xlu0 %1282, %v1275
        %v1284 = vpop.permute.xlu0 %1283
        %v1286 = vadd.f32 %v1272, %v1279
        %v1287 = vadd.f32 %v1273, %v1284
        %1288 = vrot.lane.b32.xlu0 %v1219, 124
        %v1289 = vpop.permute.xlu0 %1288
        %1290 = vrot.lane.b32.xlu0 %v1220, 124
        %v1291 = vpop.permute.xlu0 %1290
        %v1294 = vmul.f32 %v1219, %v1289
        %v1295 = vmul.f32 %v1220, %v1291
        %1298 = vrot.lane.b32.xlu0 %v1294, 124
        %v1299 = vpop.permute.xlu0 %1298
        %1300 = vrot.lane.b32.xlu0 %v1295, 124
        %v1301 = vpop.permute.xlu0 %1300
        %v1304 = vadd.f32 %v1274, %v1299
        %v1305 = vadd.f32 %v1275, %v1301
        %1306 = vset.pattern.permute.xlu0 1
        %1307 = vperm.xlu0 %1306, %v1219
        %v1308 = vpop.permute.xlu0 %1307
        %1310 = vset.pattern.permute.xlu0 1
        %1311 = vperm.xlu0 %1310, %v1220
        %v1312 = vpop.permute.xlu0 %1311
        %v1314 = vmul.f32 %v1308, %v1245
        %v1315 = vmul.f32 %v1312, %v1246
        %1316 = vset.pattern.permute.xlu0 5
        %1317 = vperm.xlu0 %1316, %v1219
        %v1318 = vpop.permute.xlu0 %1317
        %1320 = vset.pattern.permute.xlu0 5
        %1321 = vperm.xlu0 %1320, %v1220
        %v1322 = vpop.permute.xlu0 %1321
        %v1324 = vmul.f32 %v1318, %v1253
        %v1325 = vmul.f32 %v1322, %v1254
        %v1326 = vadd.f32 %v1314, %v1324
        %v1327 = vadd.f32 %v1315, %v1325
        %v1328 = vmul.f32 %v1308, %v1261
        %v1329 = vmul.f32 %v1312, %v1262
        %v1330 = vmul.f32 %v1318, %v1269
        %v1331 = vmul.f32 %v1322, %v1270
        %v1332 = vadd.f32 %v1328, %v1330
        %v1333 = vadd.f32 %v1329, %v1331
        %v1334 = vmul.f32 %v1308, %v1286
        %v1335 = vmul.f32 %v1312, %v1287
        %1336 = vset.pattern.permute.xlu0 5
        %1337 = vperm.xlu0 %1336, %v1274
        %v1338 = vpop.permute.xlu0 %1337
        %1340 = vset.pattern.permute.xlu0 5
        %1341 = vperm.xlu0 %1340, %v1275
        %v1342 = vpop.permute.xlu0 %1341
        %v1344 = vadd.f32 %v1334, %v1338
        %v1345 = vadd.f32 %v1335, %v1342
        %1348 = vrot.lane.b32.xlu0 %v1304, 5
        %v1349 = vpop.permute.xlu0 %1348
        %1350 = vrot.lane.b32.xlu0 %v1305, 5
        %v1351 = vpop.permute.xlu0 %1350
        %v1354 = vmul.f32 %v1219, %v1349
        %v1355 = vmul.f32 %v1220, %v1351
        %1358 = vrot.lane.b32.xlu0 %v1354, 124
        %v1359 = vpop.permute.xlu0 %1358
        %1360 = vrot.lane.b32.xlu0 %v1355, 124
        %v1361 = vpop.permute.xlu0 %1360
        %v1364 = vadd.f32 %v1274, %v1359
        %v1365 = vadd.f32 %v1275, %v1361
        %1366 = vset.pattern.permute.xlu0 2
        %1367 = vperm.xlu0 %1366, %v1219
        %v1368 = vpop.permute.xlu0 %1367
        %1370 = vset.pattern.permute.xlu0 2
        %1371 = vperm.xlu0 %1370, %v1220
        %v1372 = vpop.permute.xlu0 %1371
        %v1374 = vmul.f32 %v1368, %v1326
        %v1375 = vmul.f32 %v1372, %v1327
        %1376 = vset.pattern.permute.xlu0 6
        %1377 = vperm.xlu0 %1376, %v1219
        %v1378 = vpop.permute.xlu0 %1377
        %1380 = vset.pattern.permute.xlu0 6
        %1381 = vperm.xlu0 %1380, %v1220
        %v1382 = vpop.permute.xlu0 %1381
        %v1384 = vmul.f32 %v1378, %v1332
        %v1385 = vmul.f32 %v1382, %v1333
        %v1386 = vadd.f32 %v1374, %v1384
        %v1387 = vadd.f32 %v1375, %v1385
        %v1388 = vmul.f32 %v1368, %v1344
        %v1389 = vmul.f32 %v1372, %v1345
        %1392 = vrot.lane.b32.xlu0 %v1364, 5
        %v1393 = vpop.permute.xlu0 %1392
        %1394 = vrot.lane.b32.xlu0 %v1365, 5
        %v1395 = vpop.permute.xlu0 %1394
        %v1398 = vmul.f32 %v1219, %v1393
        %v1399 = vmul.f32 %v1220, %v1395
        %1401 = vset.pattern.permute.xlu0 6
        %1402 = vperm.xlu0 %1401, %v1398
        %v1403 = vpop.permute.xlu0 %1402
        %1406 = vset.pattern.permute.xlu0 6
        %1407 = vperm.xlu0 %1406, %v1399
        %v1408 = vpop.permute.xlu0 %1407
        %v1410 = vadd.f32 %v1388, %v1403
        %v1411 = vadd.f32 %v1389, %v1408
        %1412 = vset.pattern.permute.xlu0 3
        %1413 = vperm.xlu0 %1412, %v1219
        %v1414 = vpop.permute.xlu0 %1413
        %1416 = vset.pattern.permute.xlu0 3
        %1417 = vperm.xlu0 %1416, %v1220
        %v1418 = vpop.permute.xlu0 %1417
        %v1420 = vmul.f32 %v1414, %v1386
        %v1421 = vmul.f32 %v1418, %v1387
        %1422 = vset.pattern.permute.xlu0 7
        %1423 = vperm.xlu0 %1422, %v1219
        %v1424 = vpop.permute.xlu0 %1423
        %1426 = vset.pattern.permute.xlu0 7
        %1427 = vperm.xlu0 %1426, %v1220
        %v1428 = vpop.permute.xlu0 %1427
        %v1430 = vmul.f32 %v1424, %v1410
        %v1431 = vmul.f32 %v1428, %v1411
        %v1432 = vadd.f32 %v1420, %v1430
        %v1433 = vadd.f32 %v1421, %v1431
        %v1435 = vrot.slane %v1433, 3
        %v1437 = vsub.f32 %v1433, %v1435
        %v1439 = vrot.slane %v1437, 3
        %v1441 = vmul.f32 %v1432, %v1439
        %v1442 = vmul.f32 %v1433, %v1439
        %v1443 = vadd.f32 %v1433, %v1435
        %v1445 = vrot.slane %v1443, 3
        %v1447 = vadd.f32 %v1441, %v1445
        %v1448 = vadd.f32 %v1442, %v1445
        %v1449 = vmul.f32 %v1447, 0.5
        %v1450 = vmul.f32 %v1448, 0.5
        %v1451 = vsel %vm514, %v1432, %v1449
        %s1452 = scalar_lea.vmem %s1, 96
        %v1453 = vld [vmem:[%s1452] sm:$0xff]
        %v1454 = vld [vmem:[%s1452 + $0x8] sm:$0xff]
        %1456 = vset.pattern.permute.xlu0 0
        %1457 = vperm.xlu0 %1456, %v1453
        %v1458 = vpop.permute.xlu0 %1457
        %1461 = vset.pattern.permute.xlu0 0
        %1462 = vperm.xlu0 %1461, %v1454
        %v1463 = vpop.permute.xlu0 %1462
        %v1465 = vperm.slane %v1451, 0
        %v1466 = vmul.f32 %v1458, %v1465
        %v1467 = vmul.f32 %v1463, %v1465
        %1468 = vset.pattern.permute.xlu0 4
        %1469 = vperm.xlu0 %1468, %v1453
        %v1470 = vpop.permute.xlu0 %1469
        %1472 = vset.pattern.permute.xlu0 4
        %1473 = vperm.xlu0 %1472, %v1454
        %v1474 = vpop.permute.xlu0 %1473
        %v1476 = vperm.slane %v1451, 1
        %v1477 = vmul.f32 %v1470, %v1476
        %v1478 = vmul.f32 %v1474, %v1476
        %v1479 = vadd.f32 %v1466, %v1477
        %v1480 = vadd.f32 %v1467, %v1478
        %v1481 = vperm.slane %v1451, 2
        %v1482 = vmul.f32 %v1458, %v1481
        %v1483 = vmul.f32 %v1463, %v1481
        %v1484 = vperm.slane %v1451, 3
        %v1485 = vmul.f32 %v1470, %v1484
        %v1486 = vmul.f32 %v1474, %v1484
        %v1487 = vadd.f32 %v1482, %v1485
        %v1488 = vadd.f32 %v1483, %v1486
        %v1489 = vperm.slane %v1451, 4
        %v1490 = vmul.f32 %v1458, %v1489
        %v1491 = vmul.f32 %v1463, %v1489
        %v1492 = vperm.slane %v1451, 5
        %v1493 = vmul.f32 %v1470, %v1492
        %v1494 = vmul.f32 %v1474, %v1492
        %v1495 = vadd.f32 %v1490, %v1493
        %v1496 = vadd.f32 %v1491, %v1494
        %v1497 = vperm.slane %v1451, 6
        %v1498 = vmul.f32 %v1458, %v1497
        %v1499 = vmul.f32 %v1463, %v1497
        %v1500 = vperm.slane %v1451, 7
        %v1501 = vmul.f32 %v1470, %v1500
        %v1502 = vmul.f32 %v1474, %v1500
        %v1503 = vadd.f32 %v1498, %v1501
        %v1504 = vadd.f32 %v1499, %v1502
        %v1505 = vperm.slane %v1450, 0
        %v1506 = vmul.f32 %v1458, %v1505
        %v1507 = vmul.f32 %v1463, %v1505
        %v1508 = vsub.f32 0.0, %v1453
        %v1509 = vsub.f32 0.0, %v1454
        %1511 = vset.pattern.permute.xlu0 4
        %1512 = vperm.xlu0 %1511, %v1508
        %v1513 = vpop.permute.xlu0 %1512
        %1516 = vset.pattern.permute.xlu0 4
        %1517 = vperm.xlu0 %1516, %v1509
        %v1518 = vpop.permute.xlu0 %1517
        %v1520 = vadd.f32 %v1506, %v1513
        %v1521 = vadd.f32 %v1507, %v1518
        %1522 = vrot.lane.b32.xlu0 %v1453, 124
        %v1523 = vpop.permute.xlu0 %1522
        %1524 = vrot.lane.b32.xlu0 %v1454, 124
        %v1525 = vpop.permute.xlu0 %1524
        %v1528 = vmul.f32 %v1453, %v1523
        %v1529 = vmul.f32 %v1454, %v1525
        %1532 = vrot.lane.b32.xlu0 %v1528, 124
        %v1533 = vpop.permute.xlu0 %1532
        %1534 = vrot.lane.b32.xlu0 %v1529, 124
        %v1535 = vpop.permute.xlu0 %1534
        %v1538 = vadd.f32 %v1508, %v1533
        %v1539 = vadd.f32 %v1509, %v1535
        %1540 = vset.pattern.permute.xlu0 1
        %1541 = vperm.xlu0 %1540, %v1453
        %v1542 = vpop.permute.xlu0 %1541
        %1544 = vset.pattern.permute.xlu0 1
        %1545 = vperm.xlu0 %1544, %v1454
        %v1546 = vpop.permute.xlu0 %1545
        %v1548 = vmul.f32 %v1542, %v1479
        %v1549 = vmul.f32 %v1546, %v1480
        %1550 = vset.pattern.permute.xlu0 5
        %1551 = vperm.xlu0 %1550, %v1453
        %v1552 = vpop.permute.xlu0 %1551
        %1554 = vset.pattern.permute.xlu0 5
        %1555 = vperm.xlu0 %1554, %v1454
        %v1556 = vpop.permute.xlu0 %1555
        %v1558 = vmul.f32 %v1552, %v1487
        %v1559 = vmul.f32 %v1556, %v1488
        %v1560 = vadd.f32 %v1548, %v1558
        %v1561 = vadd.f32 %v1549, %v1559
        %v1562 = vmul.f32 %v1542, %v1495
        %v1563 = vmul.f32 %v1546, %v1496
        %v1564 = vmul.f32 %v1552, %v1503
        %v1565 = vmul.f32 %v1556, %v1504
        %v1566 = vadd.f32 %v1562, %v1564
        %v1567 = vadd.f32 %v1563, %v1565
        %v1568 = vmul.f32 %v1542, %v1520
        %v1569 = vmul.f32 %v1546, %v1521
        %1570 = vset.pattern.permute.xlu0 5
        %1571 = vperm.xlu0 %1570, %v1508
        %v1572 = vpop.permute.xlu0 %1571
        %1574 = vset.pattern.permute.xlu0 5
        %1575 = vperm.xlu0 %1574, %v1509
        %v1576 = vpop.permute.xlu0 %1575
        %v1578 = vadd.f32 %v1568, %v1572
        %v1579 = vadd.f32 %v1569, %v1576
        %1582 = vrot.lane.b32.xlu0 %v1538, 5
        %v1583 = vpop.permute.xlu0 %1582
        %1584 = vrot.lane.b32.xlu0 %v1539, 5
        %v1585 = vpop.permute.xlu0 %1584
        %v1588 = vmul.f32 %v1453, %v1583
        %v1589 = vmul.f32 %v1454, %v1585
        %1592 = vrot.lane.b32.xlu0 %v1588, 124
        %v1593 = vpop.permute.xlu0 %1592
        %1594 = vrot.lane.b32.xlu0 %v1589, 124
        %v1595 = vpop.permute.xlu0 %1594
        %v1598 = vadd.f32 %v1508, %v1593
        %v1599 = vadd.f32 %v1509, %v1595
        %1600 = vset.pattern.permute.xlu0 2
        %1601 = vperm.xlu0 %1600, %v1453
        %v1602 = vpop.permute.xlu0 %1601
        %1604 = vset.pattern.permute.xlu0 2
        %1605 = vperm.xlu0 %1604, %v1454
        %v1606 = vpop.permute.xlu0 %1605
        %v1608 = vmul.f32 %v1602, %v1560
        %v1609 = vmul.f32 %v1606, %v1561
        %1610 = vset.pattern.permute.xlu0 6
        %1611 = vperm.xlu0 %1610, %v1453
        %v1612 = vpop.permute.xlu0 %1611
        %1614 = vset.pattern.permute.xlu0 6
        %1615 = vperm.xlu0 %1614, %v1454
        %v1616 = vpop.permute.xlu0 %1615
        %v1618 = vmul.f32 %v1612, %v1566
        %v1619 = vmul.f32 %v1616, %v1567
        %v1620 = vadd.f32 %v1608, %v1618
        %v1621 = vadd.f32 %v1609, %v1619
        %v1622 = vmul.f32 %v1602, %v1578
        %v1623 = vmul.f32 %v1606, %v1579
        %1626 = vrot.lane.b32.xlu0 %v1598, 5
        %v1627 = vpop.permute.xlu0 %1626
        %1628 = vrot.lane.b32.xlu0 %v1599, 5
        %v1629 = vpop.permute.xlu0 %1628
        %v1632 = vmul.f32 %v1453, %v1627
        %v1633 = vmul.f32 %v1454, %v1629
        %1635 = vset.pattern.permute.xlu0 6
        %1636 = vperm.xlu0 %1635, %v1632
        %v1637 = vpop.permute.xlu0 %1636
        %1640 = vset.pattern.permute.xlu0 6
        %1641 = vperm.xlu0 %1640, %v1633
        %v1642 = vpop.permute.xlu0 %1641
        %v1644 = vadd.f32 %v1622, %v1637
        %v1645 = vadd.f32 %v1623, %v1642
        %1646 = vset.pattern.permute.xlu0 3
        %1647 = vperm.xlu0 %1646, %v1453
        %v1648 = vpop.permute.xlu0 %1647
        %1650 = vset.pattern.permute.xlu0 3
        %1651 = vperm.xlu0 %1650, %v1454
        %v1652 = vpop.permute.xlu0 %1651
        %v1654 = vmul.f32 %v1648, %v1620
        %v1655 = vmul.f32 %v1652, %v1621
        %1656 = vset.pattern.permute.xlu0 7
        %1657 = vperm.xlu0 %1656, %v1453
        %v1658 = vpop.permute.xlu0 %1657
        %1660 = vset.pattern.permute.xlu0 7
        %1661 = vperm.xlu0 %1660, %v1454
        %v1662 = vpop.permute.xlu0 %1661
        %v1664 = vmul.f32 %v1658, %v1644
        %v1665 = vmul.f32 %v1662, %v1645
        %v1666 = vadd.f32 %v1654, %v1664
        %v1667 = vadd.f32 %v1655, %v1665
        %v1670 = vrot.slane %v1666, 3
        %v1671 = vrot.slane %v1667, 3
        %v1672 = vsel %vm277, %v1670, %v1671
        %v1674 = vsub.f32 %v1666, %v1672
        %v1676 = vrot.slane %v1674, 3
        %v1678 = vmul.f32 %v1666, %v1676
        %v1679 = vadd.f32 %v1666, %v1672
        %v1681 = vrot.slane %v1679, 3
        %v1683 = vadd.f32 %v1678, %v1681
        %v1684 = vmul.f32 %v1683, 0.5
        %1685 = vst [vmem:[%s134] sm:$0x7] %v1684
        %s1686 = sand.u32 %s71, 1
        %s1687 = scalar_lea.sflag [#allocation3], %s1686
        %s1688 = sand.u32 %s71, 1
        %s1689 = smul.addr %s1688, 4
        %s1690 = scalar_lea.vmem [#allocation2], %s1689
        // Predicated region
        $region29: #{_forward_batched.1} parent=27 // pred_check
          %p1691 = pneg %p81
        $region30: #{_forward_batched.1} parent=27 // pred_check_branch
          %1693 = sbr.rel (%p1691) target = $region32
        $region31: #{_forward_batched.1} parent=27 // pred_region
          %1695 = vsyncadd %s1687, 0
          %s1696 = smul.addr %s16, 4
          %s1697 = scalar_lea.hbm %s2, %s1696
          %s1699 = sshll.u32 %s1690, 4
          %s1700 = int_to_ptr.vmem [resolvable:$true] %s1699
          %s1701 = sshll.u32 %s1697, 4
          %s1702 = int_to_ptr.hbm [resolvable:$true] %s1701
          %1704 = dma.vmem_to_hbm [thread:$0]  %s1700, 64, %s1702, %s1687
        $region32: #{_forward_batched.1} parent=27 // pred_fallthru
          _
      $region28: #{_forward_batched.1} parent=5 // pred_fallthru
        _
      %p1705 = scmp.le.s32.totalorder 2, %s11
      // Predicated region
      $region33: #{_forward_batched.1} parent=5 // pred_check
        %p1706 = pneg %p1705
      $region34: #{_forward_batched.1} parent=5 // pred_check_branch
        %1708 = sbr.rel (%p1706) target = $region36
      $region35: #{_forward_batched.1} parent=5 // pred_region
        %s1709 = ssub.s32 %s11, 2
        // Predicated region
        $region37: #{_forward_batched.1} parent=35 // pred_check
          %p1710 = pneg %p87
        $region38: #{_forward_batched.1} parent=35 // pred_check_branch
          %1712 = sbr.rel (%p1710) target = $region40
        $region39: #{_forward_batched.1} parent=35 // pred_region
          %s1713 = sand.u32 %s72, 1
          %s1714 = scalar_lea.sflag [#allocation3], %s1713
          %s1715 = sand.u32 %s72, 1
          %s1716 = smul.addr %s1715, 4
          %s1717 = scalar_lea.vmem [#allocation2], %s1716
          %1719 = dma.done %s1714, 64
        $region40: #{_forward_batched.1} parent=35 // pred_fallthru
          _
      $region36: #{_forward_batched.1} parent=5 // pred_fallthru
        _
    $region6: #{_forward_batched.1} parent=1 // loop_footer
      %s15 = sadd.s32 1, %s11
    $region7: #{_forward_batched.1} parent=1 // loop_footer_branch
      %10 = sbr.rel target = $region3
    $region8: #{_forward_batched.1} parent=1 // loop_exit
      _
    %1720 = vsyncpa [#allocation3], 1
    %s1721 = scalar_lea.sflag [#allocation3], 1
    %1722 = vsyncpa %s1721, 1

</llo_original>
